<compile_context>
chip_gen: v7x
topology: tpu7x:2x2x1
jax: 0.10.0
libtpu: 0.0.40
codegen_flags: <defaults>
</compile_context>

<pallas_src>
import functools

import jax
import jax.numpy as jnp
from jax.experimental import pallas as pl
from jax.experimental.pallas import tpu as pltpu


def _round_up(x, m):
    return ((x + m - 1) // m) * m


def _gdl_kernel(pred_ref, mask_ref, out_ref, acc_ref, *, n_classes, n_total, eps):
    """Tiled accumulation of per-class partial sums + scalar finalize.

    pred_ref : (C, TR, LANE) logits block (native dtype, upcast here)
    mask_ref : (TR, LANE)    f32 class ids; padded tail positions carry -1
    out_ref  : (1, 2) SMEM   -> [loss_g, loss_ce]
    acc_ref  : (4*C, 1, LANE) f32 VMEM persistent accumulator
               rows [0,C)   : count_i            (lane partials)
               rows [C,2C)  : sum of -log p_i over positions labelled i
               rows [2C,3C) : sum of  p_i     over positions labelled i
               rows [3C,4C) : sum of  p_i     over all (valid) positions
    """
    step = pl.program_id(0)

    @pl.when(step == 0)
    def _init():
        acc_ref[...] = jnp.zeros_like(acc_ref)

    m = mask_ref[...]
    valid = (m >= 0.0).astype(jnp.float32)        # mask == -1 marks padding

    xs = [pred_ref[i].astype(jnp.float32) for i in range(n_classes)]

    # softmax over the class axis == element-wise ops across the C slices (VPU only)
    x_max = xs[0]
    for i in range(1, n_classes):
        x_max = jnp.maximum(x_max, xs[i])
    es = [jnp.exp(x - x_max) for x in xs]         # C EUP passes
    sum_e = es[0]
    for i in range(1, n_classes):
        sum_e = sum_e + es[i]
    lse = x_max + jnp.log(sum_e)                  # 1 EUP pass (single log per position)
    inv_sum_e = 1.0 / sum_e

    for i in range(n_classes):                    # static loop, small C
        sel = (m == float(i)).astype(jnp.float32)
        p_i = es[i] * inv_sum_e                   # softmax prob of class i
        neg_logp_i = lse - xs[i]                  # -log softmax_i
        acc_ref[0 * n_classes + i] += jnp.sum(sel, axis=0, keepdims=True)
        acc_ref[1 * n_classes + i] += jnp.sum(sel * neg_logp_i, axis=0, keepdims=True)
        acc_ref[2 * n_classes + i] += jnp.sum(sel * p_i, axis=0, keepdims=True)
        acc_ref[3 * n_classes + i] += jnp.sum(p_i * valid, axis=0, keepdims=True)

    @pl.when(step == pl.num_programs(0) - 1)
    def _finalize():
        loss_ce = jnp.float32(0.0)
        fenzi = jnp.float32(0.0)
        fenmu = jnp.float32(0.0)
        for i in range(n_classes):
            cnt = jnp.sum(acc_ref[0 * n_classes + i])
            s_i = jnp.sum(acc_ref[1 * n_classes + i])
            t_i = jnp.sum(acc_ref[2 * n_classes + i])
            col_i = jnp.sum(acc_ref[3 * n_classes + i])
            present = cnt > 0.0                    # torch skips classes with no pixels
            safe_cnt = jnp.where(present, cnt, jnp.float32(1.0))
            loss_ce = loss_ce + jnp.where(present, s_i / safe_cnt, 0.0)
            fenzi = fenzi + jnp.where(present, t_i * n_total / safe_cnt, 0.0)
            fenmu = fenmu + jnp.where(present, col_i + cnt * cnt, 0.0)
        loss_g = 1.0 - 2.0 * fenzi / (fenmu + eps)
        out_ref[0, 0] = loss_g
        out_ref[0, 1] = loss_ce


def gdl_loss_pallas(preds, masks, classes=2, eps=1e-16, *, lane=512, max_block_rows=256):
    """Pallas forward of GDL_loss. Returns (loss_g, loss_ce); the module returns loss_ce."""
    preds = jnp.asarray(preds)
    masks = jnp.asarray(masks)
    assert preds.ndim == 2 and preds.shape[1] == classes, "preds must be (N, classes)"
    n = preds.shape[0]
    m_flat = masks.reshape(-1)
    assert m_flat.shape[0] == n, "masks must hold one class id per pred row"

    # Class-major, lane-dense layout; preds keep their native dtype (upcast in kernel).
    # TODO(synk): this transpose/pad is one extra XLA pass over preds; for classes==2 it
    # could be removed by de-interleaving lanes inside the kernel with pltpu.roll.
    pred_t = jnp.transpose(preds, (1, 0))                         # (C, N)

    rows = -(-n // lane)
    block_rows = max(32, min(max_block_rows, _round_up(rows, 32)))  # 32: safe for any dtype packing
    rows_pad = _round_up(rows, block_rows)
    n_pad = rows_pad * lane

    pred_p = jnp.pad(pred_t, ((0, 0), (0, n_pad - n))).reshape(classes, rows_pad, lane)
    mask_p = jnp.pad(m_flat.astype(jnp.float32), (0, n_pad - n), constant_values=-1.0)
    mask_p = mask_p.reshape(rows_pad, lane)

    grid = (rows_pad // block_rows,)
    kernel = functools.partial(
        _gdl_kernel, n_classes=classes, n_total=float(n), eps=float(eps))

    out = pl.pallas_call(
        kernel,
        out_shape=jax.ShapeDtypeStruct((1, 2), jnp.float32),
        grid=grid,
        in_specs=[
            pl.BlockSpec((classes, block_rows, lane), lambda r: (0, r, 0)),
            pl.BlockSpec((block_rows, lane), lambda r: (r, 0)),
        ],
        out_specs=pl.BlockSpec((1, 2), lambda r: (0, 0),
                               memory_space=pltpu.MemorySpace.SMEM),
        scratch_shapes=[pltpu.VMEM((4 * classes, 1, lane), jnp.float32)],
        compiler_params=pltpu.CompilerParams(
            dimension_semantics=("arbitrary",),   # reduction axis: accumulator persists
            vmem_limit_bytes=32 * 1024 * 1024,
        ),
    )(pred_p, mask_p)
    return out[0, 0], out[0, 1]


def gdl_loss_reference(preds, masks, classes=2, eps=1e-16):
    """Pure-JAX reference mirroring the PyTorch forward. Returns (loss_g, loss_ce)."""
    x = jnp.asarray(preds).astype(jnp.float32)
    logp = jax.nn.log_softmax(x, axis=1)          # == log(softmax) of the torch code
    p = jax.nn.softmax(x, axis=1)
    m = jnp.asarray(masks).reshape(-1).astype(jnp.float32)
    n_total = m.shape[0]
    loss_ce = jnp.float32(0.0)
    fenzi = jnp.float32(0.0)
    fenmu = jnp.float32(0.0)
    for i in range(classes):
        sel = m == i
        cnt = jnp.sum(sel.astype(jnp.float32))
        present = cnt > 0
        safe_w = jnp.where(present, cnt / n_total, 1.0)
        loss_ce += jnp.where(present, -jnp.sum(jnp.where(sel, logp[:, i], 0.0)) / safe_w, 0.0)
        fenzi += jnp.where(present, jnp.sum(jnp.where(sel, p[:, i], 0.0)) / safe_w, 0.0)
        fenmu += jnp.where(present, jnp.sum(p[:, i]) + cnt * cnt, 0.0)
    loss_g = 1.0 - 2.0 * fenzi / (fenmu + eps)
    return loss_g, loss_ce / n_total


def gdl_loss(preds, masks, classes=2, eps=1e-16, min_pallas_elements=1 << 15):
    """Forward of the PyTorch module: returns loss_ce.

    Tiny inputs skip Pallas (fixed launch/step overhead dominates); large ones use the kernel.
    # TODO(synk): the torch `print(loss_g, loss_ce)` side effect is not reproduced here
    # (loss_g is still computed and available from gdl_loss_pallas / gdl_loss_reference).
    """
    if preds.size < min_pallas_elements:
        return gdl_loss_reference(preds, masks, classes, eps)[1]
    return gdl_loss_pallas(preds, masks, classes, eps)[1]


if __name__ == "__main__":
    key = jax.random.PRNGKey(0)

    def check(preds, masks, classes):
        lg, lce = gdl_loss_pallas(preds, masks, classes)
        jax.block_until_ready((lg, lce))
        rg, rce = gdl_loss_reference(preds, masks, classes)
        assert jnp.allclose(lce, rce, rtol=1e-5, atol=1e-5), ("loss_ce", lce, rce)
        assert jnp.allclose(lg, rg, rtol=1e-5, atol=1e-5), ("loss_g", lg, rg)

    k1, k2, k3, k4 = jax.random.split(key, 4)

    # case 1: batch=2 of 16x16 "images" flattened -> N=512 pixels, 2 classes, f32 logits
    n1 = 2 * 16 * 16
    preds1 = jax.random.normal(k1, (n1, 2), jnp.float32)
    masks1 = jax.random.randint(k2, (n1,), 0, 2).astype(jnp.float32)
    check(preds1, masks1, classes=2)

    # case 2: non-tile-aligned N, bf16 logits + int32 masks (native-dtype ingestion path)
    n2 = 1000
    preds2 = jax.random.normal(k3, (n2, 2), jnp.float32).astype(jnp.bfloat16)
    masks2 = jax.random.randint(k4, (n2,), 0, 2)
    check(preds2, masks2, classes=2)

    # case 3: one class never occurs (exercises the count_i == 0 skip of the torch loop)
    masks3 = jnp.zeros((n1,), jnp.float32)
    check(preds1, masks3, classes=2)

    print("KERNEL_OK")
</pallas_src>

<mosaic_0001>
module attributes {stable_mosaic.version = 11 : i64} {
  func.func @_gdl_kernel(%arg0: i32, %arg1: memref<2x32x512xf32, #tpu.memory_space<vmem>>, %arg2: memref<32x512xf32, #tpu.memory_space<vmem>>, %arg3: memref<1x2xf32, #tpu.memory_space<smem>>, %arg4: memref<8x1x512xf32, #tpu.memory_space<vmem>>) attributes {dimension_semantics = [#tpu.dimension_semantics<arbitrary>], iteration_bounds = array<i64: 1>, scalar_prefetch = 0 : i64, scratch_operands = 1 : i64, tpu.core_type = #tpu.core_type<tc>, window_params = [{transform_indices = @transform_0, window_bounds = array<i64: 2, 32, 512>}, {transform_indices = @transform_1, window_bounds = array<i64: 32, 512>}, {transform_indices = @transform_2, window_bounds = array<i64: 1, 2>}]} {
    %c0_i32 = arith.constant 0 : i32
    %0 = arith.cmpi eq, %arg0, %c0_i32 : i32
    %1 = arith.extui %0 : i1 to i32
    %c0_i32_0 = arith.constant 0 : i32
    %2 = arith.cmpi ne, %1, %c0_i32_0 : i32
    scf.if %2 {
      %cst_62 = arith.constant 0.000000e+00 : f32
      %107 = vector.broadcast %cst_62 : f32 to vector<8x1x512xf32>
      %c0_63 = arith.constant 0 : index
      %c0_64 = arith.constant 0 : index
      %c0_65 = arith.constant 0 : index
      %108 = vector.load %arg4[%c0_63, %c0_64, %c0_65] : memref<8x1x512xf32, #tpu.memory_space<vmem>>, vector<8x1x512xf32>
      tpu.vector_store %arg4[%c0_63, %c0_64, %c0_65], %107 {strides = array<i32>} : memref<8x1x512xf32, #tpu.memory_space<vmem>>, vector<8x1x512xf32>,
    } else {
    }
    %c0 = arith.constant 0 : index
    %c0_1 = arith.constant 0 : index
    %3 = vector.load %arg2[%c0, %c0_1] : memref<32x512xf32, #tpu.memory_space<vmem>>, vector<32x512xf32>
    %cst = arith.constant 0.000000e+00 : f32
    %4 = vector.broadcast %cst : f32 to vector<32x512xf32>
    %5 = arith.cmpf oge, %3, %4 : vector<32x512xf32>
    %6 = arith.extui %5 : vector<32x512xi1> to vector<32x512xi32>
    %7 = arith.sitofp %6 : vector<32x512xi32> to vector<32x512xf32>
    %c0_2 = arith.constant 0 : index
    %c0_3 = arith.constant 0 : index
    %c0_4 = arith.constant 0 : index
    %8 = vector.load %arg1[%c0_2, %c0_3, %c0_4] : memref<2x32x512xf32, #tpu.memory_space<vmem>>, vector<1x32x512xf32>
    %9 = vector.shape_cast %8 : vector<1x32x512xf32> to vector<32x512xf32>
    %c1 = arith.constant 1 : index
    %c0_5 = arith.constant 0 : index
    %c0_6 = arith.constant 0 : index
    %10 = vector.load %arg1[%c1, %c0_5, %c0_6] : memref<2x32x512xf32, #tpu.memory_space<vmem>>, vector<1x32x512xf32>
    %11 = vector.shape_cast %10 : vector<1x32x512xf32> to vector<32x512xf32>
    %12 = arith.maximumf %9, %11 : vector<32x512xf32>
    %13 = arith.subf %9, %12 : vector<32x512xf32>
    %14 = math.exp %13 : vector<32x512xf32>
    %15 = arith.subf %11, %12 : vector<32x512xf32>
    %16 = math.exp %15 : vector<32x512xf32>
    %17 = arith.addf %14, %16 : vector<32x512xf32>
    %18 = math.log %17 : vector<32x512xf32>
    %19 = arith.addf %12, %18 : vector<32x512xf32>
    %cst_7 = arith.constant 1.000000e+00 : f32
    %20 = vector.broadcast %cst_7 : f32 to vector<32x512xf32>
    %21 = arith.divf %20, %17 : vector<32x512xf32>
    %cst_8 = arith.constant 0.000000e+00 : f32
    %22 = vector.broadcast %cst_8 : f32 to vector<32x512xf32>
    %23 = arith.cmpf oeq, %3, %22 : vector<32x512xf32>
    %24 = arith.extui %23 : vector<32x512xi1> to vector<32x512xi32>
    %25 = arith.sitofp %24 : vector<32x512xi32> to vector<32x512xf32>
    %26 = arith.mulf %14, %21 : vector<32x512xf32>
    %27 = arith.subf %19, %9 : vector<32x512xf32>
    %c0_9 = arith.constant 0 : index
    %c0_10 = arith.constant 0 : index
    %c0_11 = arith.constant 0 : index
    %28 = vector.load %arg4[%c0_9, %c0_10, %c0_11] : memref<8x1x512xf32, #tpu.memory_space<vmem>>, vector<1x1x512xf32>
    %29 = vector.shape_cast %28 : vector<1x1x512xf32> to vector<1x512xf32>
    %cst_12 = arith.constant dense<0.000000e+00> : vector<512xf32>
    %30 = vector.multi_reduction <add>, %25, %cst_12 [0] : vector<32x512xf32> to vector<512xf32>
    %31 = vector.shape_cast %30 : vector<512xf32> to vector<1x512xf32>
    %32 = arith.addf %29, %31 : vector<1x512xf32>
    %c0_13 = arith.constant 0 : index
    %c0_14 = arith.constant 0 : index
    %c0_15 = arith.constant 0 : index
    %33 = vector.load %arg4[%c0_13, %c0_14, %c0_15] : memref<8x1x512xf32, #tpu.memory_space<vmem>>, vector<1x1x512xf32>
    %34 = vector.shape_cast %33 : vector<1x1x512xf32> to vector<1x512xf32>
    %35 = vector.shape_cast %32 : vector<1x512xf32> to vector<1x1x512xf32>
    tpu.vector_store %arg4[%c0_13, %c0_14, %c0_15], %35 {strides = array<i32>} : memref<8x1x512xf32, #tpu.memory_space<vmem>>, vector<1x1x512xf32>,
    %c2 = arith.constant 2 : index
    %c0_16 = arith.constant 0 : index
    %c0_17 = arith.constant 0 : index
    %36 = vector.load %arg4[%c2, %c0_16, %c0_17] : memref<8x1x512xf32, #tpu.memory_space<vmem>>, vector<1x1x512xf32>
    %37 = vector.shape_cast %36 : vector<1x1x512xf32> to vector<1x512xf32>
    %38 = arith.mulf %25, %27 : vector<32x512xf32>
    %cst_18 = arith.constant dense<0.000000e+00> : vector<512xf32>
    %39 = vector.multi_reduction <add>, %38, %cst_18 [0] : vector<32x512xf32> to vector<512xf32>
    %40 = vector.shape_cast %39 : vector<512xf32> to vector<1x512xf32>
    %41 = arith.addf %37, %40 : vector<1x512xf32>
    %c2_19 = arith.constant 2 : index
    %c0_20 = arith.constant 0 : index
    %c0_21 = arith.constant 0 : index
    %42 = vector.load %arg4[%c2_19, %c0_20, %c0_21] : memref<8x1x512xf32, #tpu.memory_space<vmem>>, vector<1x1x512xf32>
    %43 = vector.shape_cast %42 : vector<1x1x512xf32> to vector<1x512xf32>
    %44 = vector.shape_cast %41 : vector<1x512xf32> to vector<1x1x512xf32>
    tpu.vector_store %arg4[%c2_19, %c0_20, %c0_21], %44 {strides = array<i32>} : memref<8x1x512xf32, #tpu.memory_space<vmem>>, vector<1x1x512xf32>,
    %c4 = arith.constant 4 : index
    %c0_22 = arith.constant 0 : index
    %c0_23 = arith.constant 0 : index
    %45 = vector.load %arg4[%c4, %c0_22, %c0_23] : memref<8x1x512xf32, #tpu.memory_space<vmem>>, vector<1x1x512xf32>
    %46 = vector.shape_cast %45 : vector<1x1x512xf32> to vector<1x512xf32>
    %47 = arith.mulf %25, %26 : vector<32x512xf32>
    %cst_24 = arith.constant dense<0.000000e+00> : vector<512xf32>
    %48 = vector.multi_reduction <add>, %47, %cst_24 [0] : vector<32x512xf32> to vector<512xf32>
    %49 = vector.shape_cast %48 : vector<512xf32> to vector<1x512xf32>
    %50 = arith.addf %46, %49 : vector<1x512xf32>
    %c4_25 = arith.constant 4 : index
    %c0_26 = arith.constant 0 : index
    %c0_27 = arith.constant 0 : index
    %51 = vector.load %arg4[%c4_25, %c0_26, %c0_27] : memref<8x1x512xf32, #tpu.memory_space<vmem>>, vector<1x1x512xf32>
    %52 = vector.shape_cast %51 : vector<1x1x512xf32> to vector<1x512xf32>
    %53 = vector.shape_cast %50 : vector<1x512xf32> to vector<1x1x512xf32>
    tpu.vector_store %arg4[%c4_25, %c0_26, %c0_27], %53 {strides = array<i32>} : memref<8x1x512xf32, #tpu.memory_space<vmem>>, vector<1x1x512xf32>,
    %c6 = arith.constant 6 : index
    %c0_28 = arith.constant 0 : index
    %c0_29 = arith.constant 0 : index
    %54 = vector.load %arg4[%c6, %c0_28, %c0_29] : memref<8x1x512xf32, #tpu.memory_space<vmem>>, vector<1x1x512xf32>
    %55 = vector.shape_cast %54 : vector<1x1x512xf32> to vector<1x512xf32>
    %56 = arith.mulf %26, %7 : vector<32x512xf32>
    %cst_30 = arith.constant dense<0.000000e+00> : vector<512xf32>
    %57 = vector.multi_reduction <add>, %56, %cst_30 [0] : vector<32x512xf32> to vector<512xf32>
    %58 = vector.shape_cast %57 : vector<512xf32> to vector<1x512xf32>
    %59 = arith.addf %55, %58 : vector<1x512xf32>
    %c6_31 = arith.constant 6 : index
    %c0_32 = arith.constant 0 : index
    %c0_33 = arith.constant 0 : index
    %60 = vector.load %arg4[%c6_31, %c0_32, %c0_33] : memref<8x1x512xf32, #tpu.memory_space<vmem>>, vector<1x1x512xf32>
    %61 = vector.shape_cast %60 : vector<1x1x512xf32> to vector<1x512xf32>
    %62 = vector.shape_cast %59 : vector<1x512xf32> to vector<1x1x512xf32>
    tpu.vector_store %arg4[%c6_31, %c0_32, %c0_33], %62 {strides = array<i32>} : memref<8x1x512xf32, #tpu.memory_space<vmem>>, vector<1x1x512xf32>,
    %cst_34 = arith.constant 1.000000e+00 : f32
    %63 = vector.broadcast %cst_34 : f32 to vector<32x512xf32>
    %64 = arith.cmpf oeq, %3, %63 : vector<32x512xf32>
    %65 = arith.extui %64 : vector<32x512xi1> to vector<32x512xi32>
    %66 = arith.sitofp %65 : vector<32x512xi32> to vector<32x512xf32>
    %67 = arith.mulf %16, %21 : vector<32x512xf32>
    %68 = arith.subf %19, %11 : vector<32x512xf32>
    %c1_35 = arith.constant 1 : index
    %c0_36 = arith.constant 0 : index
    %c0_37 = arith.constant 0 : index
    %69 = vector.load %arg4[%c1_35, %c0_36, %c0_37] : memref<8x1x512xf32, #tpu.memory_space<vmem>>, vector<1x1x512xf32>
    %70 = vector.shape_cast %69 : vector<1x1x512xf32> to vector<1x512xf32>
    %cst_38 = arith.constant dense<0.000000e+00> : vector<512xf32>
    %71 = vector.multi_reduction <add>, %66, %cst_38 [0] : vector<32x512xf32> to vector<512xf32>
    %72 = vector.shape_cast %71 : vector<512xf32> to vector<1x512xf32>
    %73 = arith.addf %70, %72 : vector<1x512xf32>
    %c1_39 = arith.constant 1 : index
    %c0_40 = arith.constant 0 : index
    %c0_41 = arith.constant 0 : index
    %74 = vector.load %arg4[%c1_39, %c0_40, %c0_41] : memref<8x1x512xf32, #tpu.memory_space<vmem>>, vector<1x1x512xf32>
    %75 = vector.shape_cast %74 : vector<1x1x512xf32> to vector<1x512xf32>
    %76 = vector.shape_cast %73 : vector<1x512xf32> to vector<1x1x512xf32>
    tpu.vector_store %arg4[%c1_39, %c0_40, %c0_41], %76 {strides = array<i32>} : memref<8x1x512xf32, #tpu.memory_space<vmem>>, vector<1x1x512xf32>,
    %c3 = arith.constant 3 : index
    %c0_42 = arith.constant 0 : index
    %c0_43 = arith.constant 0 : index
    %77 = vector.load %arg4[%c3, %c0_42, %c0_43] : memref<8x1x512xf32, #tpu.memory_space<vmem>>, vector<1x1x512xf32>
    %78 = vector.shape_cast %77 : vector<1x1x512xf32> to vector<1x512xf32>
    %79 = arith.mulf %66, %68 : vector<32x512xf32>
    %cst_44 = arith.constant dense<0.000000e+00> : vector<512xf32>
    %80 = vector.multi_reduction <add>, %79, %cst_44 [0] : vector<32x512xf32> to vector<512xf32>
    %81 = vector.shape_cast %80 : vector<512xf32> to vector<1x512xf32>
    %82 = arith.addf %78, %81 : vector<1x512xf32>
    %c3_45 = arith.constant 3 : index
    %c0_46 = arith.constant 0 : index
    %c0_47 = arith.constant 0 : index
    %83 = vector.load %arg4[%c3_45, %c0_46, %c0_47] : memref<8x1x512xf32, #tpu.memory_space<vmem>>, vector<1x1x512xf32>
    %84 = vector.shape_cast %83 : vector<1x1x512xf32> to vector<1x512xf32>
    %85 = vector.shape_cast %82 : vector<1x512xf32> to vector<1x1x512xf32>
    tpu.vector_store %arg4[%c3_45, %c0_46, %c0_47], %85 {strides = array<i32>} : memref<8x1x512xf32, #tpu.memory_space<vmem>>, vector<1x1x512xf32>,
    %c5 = arith.constant 5 : index
    %c0_48 = arith.constant 0 : index
    %c0_49 = arith.constant 0 : index
    %86 = vector.load %arg4[%c5, %c0_48, %c0_49] : memref<8x1x512xf32, #tpu.memory_space<vmem>>, vector<1x1x512xf32>
    %87 = vector.shape_cast %86 : vector<1x1x512xf32> to vector<1x512xf32>
    %88 = arith.mulf %66, %67 : vector<32x512xf32>
    %cst_50 = arith.constant dense<0.000000e+00> : vector<512xf32>
    %89 = vector.multi_reduction <add>, %88, %cst_50 [0] : vector<32x512xf32> to vector<512xf32>
    %90 = vector.shape_cast %89 : vector<512xf32> to vector<1x512xf32>
    %91 = arith.addf %87, %90 : vector<1x512xf32>
    %c5_51 = arith.constant 5 : index
    %c0_52 = arith.constant 0 : index
    %c0_53 = arith.constant 0 : index
    %92 = vector.load %arg4[%c5_51, %c0_52, %c0_53] : memref<8x1x512xf32, #tpu.memory_space<vmem>>, vector<1x1x512xf32>
    %93 = vector.shape_cast %92 : vector<1x1x512xf32> to vector<1x512xf32>
    %94 = vector.shape_cast %91 : vector<1x512xf32> to vector<1x1x512xf32>
    tpu.vector_store %arg4[%c5_51, %c0_52, %c0_53], %94 {strides = array<i32>} : memref<8x1x512xf32, #tpu.memory_space<vmem>>, vector<1x1x512xf32>,
    %c7 = arith.constant 7 : index
    %c0_54 = arith.constant 0 : index
    %c0_55 = arith.constant 0 : index
    %95 = vector.load %arg4[%c7, %c0_54, %c0_55] : memref<8x1x512xf32, #tpu.memory_space<vmem>>, vector<1x1x512xf32>
    %96 = vector.shape_cast %95 : vector<1x1x512xf32> to vector<1x512xf32>
    %97 = arith.mulf %67, %7 : vector<32x512xf32>
    %cst_56 = arith.constant dense<0.000000e+00> : vector<512xf32>
    %98 = vector.multi_reduction <add>, %97, %cst_56 [0] : vector<32x512xf32> to vector<512xf32>
    %99 = vector.shape_cast %98 : vector<512xf32> to vector<1x512xf32>
    %100 = arith.addf %96, %99 : vector<1x512xf32>
    %c7_57 = arith.constant 7 : index
    %c0_58 = arith.constant 0 : index
    %c0_59 = arith.constant 0 : index
    %101 = vector.load %arg4[%c7_57, %c0_58, %c0_59] : memref<8x1x512xf32, #tpu.memory_space<vmem>>, vector<1x1x512xf32>
    %102 = vector.shape_cast %101 : vector<1x1x512xf32> to vector<1x512xf32>
    %103 = vector.shape_cast %100 : vector<1x512xf32> to vector<1x1x512xf32>
    tpu.vector_store %arg4[%c7_57, %c0_58, %c0_59], %103 {strides = array<i32>} : memref<8x1x512xf32, #tpu.memory_space<vmem>>, vector<1x1x512xf32>,
    %c0_i32_60 = arith.constant 0 : i32
    %104 = arith.cmpi eq, %arg0, %c0_i32_60 : i32
    %105 = arith.extui %104 : i1 to i32
    %c0_i32_61 = arith.constant 0 : i32
    %106 = arith.cmpi ne, %105, %c0_i32_61 : i32
    scf.if %106 {
      %c0_62 = arith.constant 0 : index
      %c0_63 = arith.constant 0 : index
      %c0_64 = arith.constant 0 : index
      %107 = vector.load %arg4[%c0_62, %c0_63, %c0_64] : memref<8x1x512xf32, #tpu.memory_space<vmem>>, vector<1x1x512xf32>
      %108 = vector.shape_cast %107 : vector<1x1x512xf32> to vector<1x512xf32>
      %109 = vector.shape_cast %108 : vector<1x512xf32> to vector<1x1x512xf32>
      %cst_65 = arith.constant dense<0.000000e+00> : vector<1xf32>
      %110 = vector.multi_reduction <add>, %109, %cst_65 [1, 2] : vector<1x1x512xf32> to vector<1xf32>
      %111 = vector.shape_cast %110 : vector<1xf32> to vector<1x1x1xf32>
      %112 = vector.extract %111[0, 0, 0] : f32 from vector<1x1x1xf32>
      %c2_66 = arith.constant 2 : index
      %c0_67 = arith.constant 0 : index
      %c0_68 = arith.constant 0 : index
      %113 = vector.load %arg4[%c2_66, %c0_67, %c0_68] : memref<8x1x512xf32, #tpu.memory_space<vmem>>, vector<1x1x512xf32>
      %114 = vector.shape_cast %113 : vector<1x1x512xf32> to vector<1x512xf32>
      %115 = vector.shape_cast %114 : vector<1x512xf32> to vector<1x1x512xf32>
      %cst_69 = arith.constant dense<0.000000e+00> : vector<1xf32>
      %116 = vector.multi_reduction <add>, %115, %cst_69 [1, 2] : vector<1x1x512xf32> to vector<1xf32>
      %117 = vector.shape_cast %116 : vector<1xf32> to vector<1x1x1xf32>
      %118 = vector.extract %117[0, 0, 0] : f32 from vector<1x1x1xf32>
      %c4_70 = arith.constant 4 : index
      %c0_71 = arith.constant 0 : index
      %c0_72 = arith.constant 0 : index
      %119 = vector.load %arg4[%c4_70, %c0_71, %c0_72] : memref<8x1x512xf32, #tpu.memory_space<vmem>>, vector<1x1x512xf32>
      %120 = vector.shape_cast %119 : vector<1x1x512xf32> to vector<1x512xf32>
      %121 = vector.shape_cast %120 : vector<1x512xf32> to vector<1x1x512xf32>
      %cst_73 = arith.constant dense<0.000000e+00> : vector<1xf32>
      %122 = vector.multi_reduction <add>, %121, %cst_73 [1, 2] : vector<1x1x512xf32> to vector<1xf32>
      %123 = vector.shape_cast %122 : vector<1xf32> to vector<1x1x1xf32>
      %124 = vector.extract %123[0, 0, 0] : f32 from vector<1x1x1xf32>
      %c6_74 = arith.constant 6 : index
      %c0_75 = arith.constant 0 : index
      %c0_76 = arith.constant 0 : index
      %125 = vector.load %arg4[%c6_74, %c0_75, %c0_76] : memref<8x1x512xf32, #tpu.memory_space<vmem>>, vector<1x1x512xf32>
      %126 = vector.shape_cast %125 : vector<1x1x512xf32> to vector<1x512xf32>
      %127 = vector.shape_cast %126 : vector<1x512xf32> to vector<1x1x512xf32>
      %cst_77 = arith.constant dense<0.000000e+00> : vector<1xf32>
      %128 = vector.multi_reduction <add>, %127, %cst_77 [1, 2] : vector<1x1x512xf32> to vector<1xf32>
      %129 = vector.shape_cast %128 : vector<1xf32> to vector<1x1x1xf32>
      %130 = vector.extract %129[0, 0, 0] : f32 from vector<1x1x1xf32>
      %cst_78 = arith.constant 0.000000e+00 : f32
      %131 = arith.cmpf ogt, %112, %cst_78 : f32
      %cst_79 = arith.constant 1.000000e+00 : f32
      %132 = arith.select %131, %112, %cst_79 : f32
      %133 = arith.divf %118, %132 : f32
      %cst_80 = arith.constant 0.000000e+00 : f32
      %134 = arith.select %131, %133, %cst_80 : f32
      %cst_81 = arith.constant 0.000000e+00 : f32
      %135 = arith.addf %cst_81, %134 : f32
      %cst_82 = arith.constant 5.120000e+02 : f32
      %136 = arith.mulf %124, %cst_82 : f32
      %137 = arith.divf %136, %132 : f32
      %cst_83 = arith.constant 0.000000e+00 : f32
      %138 = arith.select %131, %137, %cst_83 : f32
      %cst_84 = arith.constant 0.000000e+00 : f32
      %139 = arith.addf %cst_84, %138 : f32
      %140 = arith.mulf %112, %112 : f32
      %141 = arith.addf %130, %140 : f32
      %cst_85 = arith.constant 0.000000e+00 : f32
      %142 = arith.select %131, %141, %cst_85 : f32
      %cst_86 = arith.constant 0.000000e+00 : f32
      %143 = arith.addf %cst_86, %142 : f32
      %c1_87 = arith.constant 1 : index
      %c0_88 = arith.constant 0 : index
      %c0_89 = arith.constant 0 : index
      %144 = vector.load %arg4[%c1_87, %c0_88, %c0_89] : memref<8x1x512xf32, #tpu.memory_space<vmem>>, vector<1x1x512xf32>
      %145 = vector.shape_cast %144 : vector<1x1x512xf32> to vector<1x512xf32>
      %146 = vector.shape_cast %145 : vector<1x512xf32> to vector<1x1x512xf32>
      %cst_90 = arith.constant dense<0.000000e+00> : vector<1xf32>
      %147 = vector.multi_reduction <add>, %146, %cst_90 [1, 2] : vector<1x1x512xf32> to vector<1xf32>
      %148 = vector.shape_cast %147 : vector<1xf32> to vector<1x1x1xf32>
      %149 = vector.extract %148[0, 0, 0] : f32 from vector<1x1x1xf32>
      %c3_91 = arith.constant 3 : index
      %c0_92 = arith.constant 0 : index
      %c0_93 = arith.constant 0 : index
      %150 = vector.load %arg4[%c3_91, %c0_92, %c0_93] : memref<8x1x512xf32, #tpu.memory_space<vmem>>, vector<1x1x512xf32>
      %151 = vector.shape_cast %150 : vector<1x1x512xf32> to vector<1x512xf32>
      %152 = vector.shape_cast %151 : vector<1x512xf32> to vector<1x1x512xf32>
      %cst_94 = arith.constant dense<0.000000e+00> : vector<1xf32>
      %153 = vector.multi_reduction <add>, %152, %cst_94 [1, 2] : vector<1x1x512xf32> to vector<1xf32>
      %154 = vector.shape_cast %153 : vector<1xf32> to vector<1x1x1xf32>
      %155 = vector.extract %154[0, 0, 0] : f32 from vector<1x1x1xf32>
      %c5_95 = arith.constant 5 : index
      %c0_96 = arith.constant 0 : index
      %c0_97 = arith.constant 0 : index
      %156 = vector.load %arg4[%c5_95, %c0_96, %c0_97] : memref<8x1x512xf32, #tpu.memory_space<vmem>>, vector<1x1x512xf32>
      %157 = vector.shape_cast %156 : vector<1x1x512xf32> to vector<1x512xf32>
      %158 = vector.shape_cast %157 : vector<1x512xf32> to vector<1x1x512xf32>
      %cst_98 = arith.constant dense<0.000000e+00> : vector<1xf32>
      %159 = vector.multi_reduction <add>, %158, %cst_98 [1, 2] : vector<1x1x512xf32> to vector<1xf32>
      %160 = vector.shape_cast %159 : vector<1xf32> to vector<1x1x1xf32>
      %161 = vector.extract %160[0, 0, 0] : f32 from vector<1x1x1xf32>
      %c7_99 = arith.constant 7 : index
      %c0_100 = arith.constant 0 : index
      %c0_101 = arith.constant 0 : index
      %162 = vector.load %arg4[%c7_99, %c0_100, %c0_101] : memref<8x1x512xf32, #tpu.memory_space<vmem>>, vector<1x1x512xf32>
      %163 = vector.shape_cast %162 : vector<1x1x512xf32> to vector<1x512xf32>
      %164 = vector.shape_cast %163 : vector<1x512xf32> to vector<1x1x512xf32>
      %cst_102 = arith.constant dense<0.000000e+00> : vector<1xf32>
      %165 = vector.multi_reduction <add>, %164, %cst_102 [1, 2] : vector<1x1x512xf32> to vector<1xf32>
      %166 = vector.shape_cast %165 : vector<1xf32> to vector<1x1x1xf32>
      %167 = vector.extract %166[0, 0, 0] : f32 from vector<1x1x1xf32>
      %cst_103 = arith.constant 0.000000e+00 : f32
      %168 = arith.cmpf ogt, %149, %cst_103 : f32
      %cst_104 = arith.constant 1.000000e+00 : f32
      %169 = arith.select %168, %149, %cst_104 : f32
      %170 = arith.divf %155, %169 : f32
      %cst_105 = arith.constant 0.000000e+00 : f32
      %171 = arith.select %168, %170, %cst_105 : f32
      %172 = arith.addf %135, %171 : f32
      %cst_106 = arith.constant 5.120000e+02 : f32
      %173 = arith.mulf %161, %cst_106 : f32
      %174 = arith.divf %173, %169 : f32
      %cst_107 = arith.constant 0.000000e+00 : f32
      %175 = arith.select %168, %174, %cst_107 : f32
      %176 = arith.addf %139, %175 : f32
      %177 = arith.mulf %149, %149 : f32
      %178 = arith.addf %167, %177 : f32
      %cst_108 = arith.constant 0.000000e+00 : f32
      %179 = arith.select %168, %178, %cst_108 : f32
      %180 = arith.addf %143, %179 : f32
      %cst_109 = arith.constant 2.000000e+00 : f32
      %181 = arith.mulf %cst_109, %176 : f32
      %cst_110 = arith.constant 1.000000e-16 : f32
      %182 = arith.addf %180, %cst_110 : f32
      %183 = arith.divf %181, %182 : f32
      %cst_111 = arith.constant 1.000000e+00 : f32
      %184 = arith.subf %cst_111, %183 : f32
      %c0_112 = arith.constant 0 : index
      %c0_113 = arith.constant 0 : index
      %185 = memref.load %arg3[%c0_112, %c0_113] : memref<1x2xf32, #tpu.memory_space<smem>>
      memref.store %184, %arg3[%c0_112, %c0_113] : memref<1x2xf32, #tpu.memory_space<smem>>
      %c0_114 = arith.constant 0 : index
      %c1_115 = arith.constant 1 : index
      %186 = memref.load %arg3[%c0_114, %c1_115] : memref<1x2xf32, #tpu.memory_space<smem>>
      memref.store %172, %arg3[%c0_114, %c1_115] : memref<1x2xf32, #tpu.memory_space<smem>>
    } else {
    }
    return
  }
  func.func @transform_0(%arg0: i32) -> (i32, i32, i32) {
    %c0_i32 = arith.constant 0 : i32
    %c0_i32_0 = arith.constant 0 : i32
    %c0_i32_1 = arith.constant 0 : i32
    return %c0_i32, %arg0, %c0_i32_0 : i32, i32, i32
  }
  func.func @transform_1(%arg0: i32) -> (i32, i32) {
    %c0_i32 = arith.constant 0 : i32
    %c0_i32_0 = arith.constant 0 : i32
    return %arg0, %c0_i32 : i32, i32
  }
  func.func @transform_2(%arg0: i32) -> (i32, i32) {
    %c0_i32 = arith.constant 0 : i32
    %c0_i32_0 = arith.constant 0 : i32
    %c0_i32_1 = arith.constant 0 : i32
    return %c0_i32, %c0_i32_0 : i32, i32
  }
}

</mosaic_0001>

<llo_original>
// kernel: tpu_custom_call.1
$region0: #{tpu_custom_call.1}
  #allocation0 [shape = 'u32[]', space=smem, size = 0x4, offset = 0x4, fixed_abs, tag = 'smem constant byte address 0x4 - core index']
  #allocation1 [shape = 'u32[144,128]{1,0:T(1,128)}', space=vmem, size = 0x12000, scoped, tag = 'internal scratch']
  #allocation2 [shape = 'f32[8,1,512]{2,1,0:T(1,128)}', space=vmem, size = 0x4000, scoped, tag = 'scratch operand']
  %s0 = inlined_call_operand.hbm [shape: f32[2,32,512], index: 0, kind: input, shape index: {}]
  %s1 = inlined_call_operand.hbm [shape: f32[32,512], index: 1, kind: input, shape index: {}]
  %s2 = inlined_call_operand.hbm [shape: f32[1,2], index: 2, kind: output, shape index: {}]
  %s3 = sld [smem:[#allocation0]]
  $region34: #{tpu_custom_call.1} parent=0
    _
  %s5 = ssub.s32 1, %s3
  %s6 = scalar_select 0, %s5, %s3
  $region1: #{tpu_custom_call.1} parent=0
    #allocation3 [shape = 'u8[131072]{0}', space=vmem, size = 0x20000, scoped, tag = 'input window, operand 0, single buffered']
    #allocation4 [shape = 's32[1]{0}', space=sflag, size = 0x4, scoped, tag = 'scoped memory for tpu_custom_call.1']
    #allocation5 [shape = 's32[1]{0}', space=sflag, size = 0x4, scoped, tag = 'scoped memory for tpu_custom_call.1']
    #allocation6 [shape = 'u8[65536]{0}', space=vmem, size = 0x10000, scoped, tag = 'input window, operand 1, single buffered']
    #allocation7 [shape = 's32[1]{0}', space=sflag, size = 0x4, scoped, tag = 'scoped memory for tpu_custom_call.1']
    #allocation8 [shape = 'u8[512]{0}', space=smem, size = 0x200, scoped, tag = 'output window, operand 0, single buffered']
    %7 = vsyncpa [#allocation4], 0
    %8 = vsyncpa [#allocation7], 0
    %9 = vsyncpa [#allocation5], 0
    // Predicated region
    $region2: #{tpu_custom_call.1} parent=1 // pred_check
      _
    $region3: #{tpu_custom_call.1} parent=1 // pred_check_branch
      %11 = sbr.rel (0) target = $region5
    $region4: #{tpu_custom_call.1} parent=1 // pred_region
      %s13 = ssub.s32 4096, 4096
      %14 = vsyncadd [#allocation4], %s13
      %s15 = sshll.u32 [#allocation3], 4
      %s16 = int_to_ptr.vmem [resolvable:$true] %s15
      %21 = dma.hbm_to_vmem [thread:$0]  %s0, 4096, %s16, [#allocation4], 512, 512, 32
    $region5: #{tpu_custom_call.1} parent=1 // pred_fallthru
      _
    // Predicated region
    $region6: #{tpu_custom_call.1} parent=1 // pred_check
      _
    $region7: #{tpu_custom_call.1} parent=1 // pred_check_branch
      %23 = sbr.rel (0) target = $region9
    $region8: #{tpu_custom_call.1} parent=1 // pred_region
      %s25 = ssub.s32 2048, 2048
      %26 = vsyncadd [#allocation7], %s25
      %s27 = sshll.u32 [#allocation6], 4
      %s28 = int_to_ptr.vmem [resolvable:$true] %s27
      %33 = dma.hbm_to_vmem [thread:$0]  %s1, 2048, %s28, [#allocation7], 512, 512, 32
    $region9: #{tpu_custom_call.1} parent=1 // pred_fallthru
      _
    // Predicated region
    $region10: #{tpu_custom_call.1} parent=1 // pred_check
      _
    $region11: #{tpu_custom_call.1} parent=1 // pred_check_branch
      %35 = sbr.rel (0) target = $region13
    $region12: #{tpu_custom_call.1} parent=1 // pred_region
      %36 = dma.done [#allocation4], 4096
    $region13: #{tpu_custom_call.1} parent=1 // pred_fallthru
      _
    // Predicated region
    $region14: #{tpu_custom_call.1} parent=1 // pred_check
      _
    $region15: #{tpu_custom_call.1} parent=1 // pred_check_branch
      %38 = sbr.rel (0) target = $region17
    $region16: #{tpu_custom_call.1} parent=1 // pred_region
      %39 = dma.done [#allocation7], 2048
    $region17: #{tpu_custom_call.1} parent=1 // pred_fallthru
      _
    %p40 = scmp.eq.s32.totalorder 0, 0
    // Predicated region
    $region18: #{tpu_custom_call.1} parent=1 // pred_check
      %p41 = pneg %p40
    $region19: #{tpu_custom_call.1} parent=1 // pred_check_branch
      %43 = sbr.rel (%p41) target = $region21
    $region20: #{tpu_custom_call.1} parent=1 // pred_region
      %v44 = vlaneseq
      %vm45 = vcmp.ge.s32.totalorder %v44, 0
      %vm46 = vcmp.lt.s32.totalorder %v44, 512
      %vm47 = vmand %vm45, %vm46
      %48 = vst.msk [vmem:[#allocation2] sm:$0xf] %vm47, 0.0
      %49 = vst.msk [vmem:[#allocation2 + $0x4] sm:$0xf] %vm47, 0.0
      %50 = vst.msk [vmem:[#allocation2 + $0x8] sm:$0xf] %vm47, 0.0
      %51 = vst.msk [vmem:[#allocation2 + $0xc] sm:$0xf] %vm47, 0.0
      %52 = vst.msk [vmem:[#allocation2 + $0x10] sm:$0xf] %vm47, 0.0
      %53 = vst.msk [vmem:[#allocation2 + $0x14] sm:$0xf] %vm47, 0.0
      %54 = vst.msk [vmem:[#allocation2 + $0x18] sm:$0xf] %vm47, 0.0
      %55 = vst.msk [vmem:[#allocation2 + $0x1c] sm:$0xf] %vm47, 0.0
    $region21: #{tpu_custom_call.1} parent=1 // pred_fallthru
      _
    %v56 = vld [vmem:[#allocation6] sm:$0xff]
    %v57 = vld [vmem:[#allocation6 + $0x8] sm:$0xff]
    %v58 = vld [vmem:[#allocation6 + $0x10] sm:$0xff]
    %v59 = vld [vmem:[#allocation6 + $0x18] sm:$0xff]
    %v60 = vld [vmem:[#allocation6 + $0x20] sm:$0xff]
    %v61 = vld [vmem:[#allocation6 + $0x28] sm:$0xff]
    %v62 = vld [vmem:[#allocation6 + $0x30] sm:$0xff]
    %v63 = vld [vmem:[#allocation6 + $0x38] sm:$0xff]
    %v64 = vld [vmem:[#allocation6 + $0x40] sm:$0xff]
    %v65 = vld [vmem:[#allocation6 + $0x48] sm:$0xff]
    %v66 = vld [vmem:[#allocation6 + $0x50] sm:$0xff]
    %v67 = vld [vmem:[#allocation6 + $0x58] sm:$0xff]
    %v68 = vld [vmem:[#allocation6 + $0x60] sm:$0xff]
    %v69 = vld [vmem:[#allocation6 + $0x68] sm:$0xff]
    %v70 = vld [vmem:[#allocation6 + $0x70] sm:$0xff]
    %v71 = vld [vmem:[#allocation6 + $0x78] sm:$0xff]
    %vm72 = vcmp.ge.f32.partialorder %v56, 0.0
    %vm73 = vcmp.ge.f32.partialorder %v57, 0.0
    %vm74 = vcmp.ge.f32.partialorder %v58, 0.0
    %vm75 = vcmp.ge.f32.partialorder %v59, 0.0
    %vm76 = vcmp.ge.f32.partialorder %v60, 0.0
    %vm77 = vcmp.ge.f32.partialorder %v61, 0.0
    %vm78 = vcmp.ge.f32.partialorder %v62, 0.0
    %vm79 = vcmp.ge.f32.partialorder %v63, 0.0
    %vm80 = vcmp.ge.f32.partialorder %v64, 0.0
    %vm81 = vcmp.ge.f32.partialorder %v65, 0.0
    %vm82 = vcmp.ge.f32.partialorder %v66, 0.0
    %vm83 = vcmp.ge.f32.partialorder %v67, 0.0
    %vm84 = vcmp.ge.f32.partialorder %v68, 0.0
    %vm85 = vcmp.ge.f32.partialorder %v69, 0.0
    %vm86 = vcmp.ge.f32.partialorder %v70, 0.0
    %vm87 = vcmp.ge.f32.partialorder %v71, 0.0
    %v88 = vsel %vm72, 1, 0
    %v89 = vsel %vm73, 1, 0
    %v90 = vsel %vm74, 1, 0
    %v91 = vsel %vm75, 1, 0
    %v92 = vsel %vm76, 1, 0
    %v93 = vsel %vm77, 1, 0
    %v94 = vsel %vm78, 1, 0
    %v95 = vsel %vm79, 1, 0
    %v96 = vsel %vm80, 1, 0
    %v97 = vsel %vm81, 1, 0
    %v98 = vsel %vm82, 1, 0
    %v99 = vsel %vm83, 1, 0
    %v100 = vsel %vm84, 1, 0
    %v101 = vsel %vm85, 1, 0
    %v102 = vsel %vm86, 1, 0
    %v103 = vsel %vm87, 1, 0
    %v104 = vcvt.s32.f32 %v88
    %v105 = vcvt.s32.f32 %v89
    %v106 = vcvt.s32.f32 %v90
    %v107 = vcvt.s32.f32 %v91
    %v108 = vcvt.s32.f32 %v92
    %v109 = vcvt.s32.f32 %v93
    %v110 = vcvt.s32.f32 %v94
    %v111 = vcvt.s32.f32 %v95
    %v112 = vcvt.s32.f32 %v96
    %v113 = vcvt.s32.f32 %v97
    %v114 = vcvt.s32.f32 %v98
    %v115 = vcvt.s32.f32 %v99
    %v116 = vcvt.s32.f32 %v100
    %v117 = vcvt.s32.f32 %v101
    %v118 = vcvt.s32.f32 %v102
    %v119 = vcvt.s32.f32 %v103
    %v120 = vld [vmem:[#allocation3] sm:$0xff]
    %v121 = vld [vmem:[#allocation3 + $0x8] sm:$0xff]
    %v122 = vld [vmem:[#allocation3 + $0x10] sm:$0xff]
    %v123 = vld [vmem:[#allocation3 + $0x18] sm:$0xff]
    %v124 = vld [vmem:[#allocation3 + $0x20] sm:$0xff]
    %v125 = vld [vmem:[#allocation3 + $0x28] sm:$0xff]
    %v126 = vld [vmem:[#allocation3 + $0x30] sm:$0xff]
    %v127 = vld [vmem:[#allocation3 + $0x38] sm:$0xff]
    %v128 = vld [vmem:[#allocation3 + $0x40] sm:$0xff]
    %v129 = vld [vmem:[#allocation3 + $0x48] sm:$0xff]
    %v130 = vld [vmem:[#allocation3 + $0x50] sm:$0xff]
    %v131 = vld [vmem:[#allocation3 + $0x58] sm:$0xff]
    %v132 = vld [vmem:[#allocation3 + $0x60] sm:$0xff]
    %v133 = vld [vmem:[#allocation3 + $0x68] sm:$0xff]
    %v134 = vld [vmem:[#allocation3 + $0x70] sm:$0xff]
    %v135 = vld [vmem:[#allocation3 + $0x78] sm:$0xff]
    %s136 = scalar_lea.vmem [#allocation3], 128
    %v137 = vld [vmem:[%s136] sm:$0xff]
    %v138 = vld [vmem:[%s136 + $0x8] sm:$0xff]
    %v139 = vld [vmem:[%s136 + $0x10] sm:$0xff]
    %v140 = vld [vmem:[%s136 + $0x18] sm:$0xff]
    %v141 = vld [vmem:[%s136 + $0x20] sm:$0xff]
    %v142 = vld [vmem:[%s136 + $0x28] sm:$0xff]
    %v143 = vld [vmem:[%s136 + $0x30] sm:$0xff]
    %v144 = vld [vmem:[%s136 + $0x38] sm:$0xff]
    %v145 = vld [vmem:[%s136 + $0x40] sm:$0xff]
    %v146 = vld [vmem:[%s136 + $0x48] sm:$0xff]
    %v147 = vld [vmem:[%s136 + $0x50] sm:$0xff]
    %v148 = vld [vmem:[%s136 + $0x58] sm:$0xff]
    %v149 = vld [vmem:[%s136 + $0x60] sm:$0xff]
    %v150 = vld [vmem:[%s136 + $0x68] sm:$0xff]
    %v151 = vld [vmem:[%s136 + $0x70] sm:$0xff]
    %v152 = vld [vmem:[%s136 + $0x78] sm:$0xff]
    %v153 = vmax.f32 %v120, %v137
    %v154 = vmax.f32 %v121, %v138
    %v155 = vmax.f32 %v122, %v139
    %v156 = vmax.f32 %v123, %v140
    %v157 = vmax.f32 %v124, %v141
    %v158 = vmax.f32 %v125, %v142
    %v159 = vmax.f32 %v126, %v143
    %v160 = vmax.f32 %v127, %v144
    %v161 = vmax.f32 %v128, %v145
    %v162 = vmax.f32 %v129, %v146
    %v163 = vmax.f32 %v130, %v147
    %v164 = vmax.f32 %v131, %v148
    %v165 = vmax.f32 %v132, %v149
    %v166 = vmax.f32 %v133, %v150
    %v167 = vmax.f32 %v134, %v151
    %v168 = vmax.f32 %v135, %v152
    %v169 = vsub.f32 %v120, %v153
    %v170 = vsub.f32 %v121, %v154
    %v171 = vsub.f32 %v122, %v155
    %v172 = vsub.f32 %v123, %v156
    %v173 = vsub.f32 %v124, %v157
    %v174 = vsub.f32 %v125, %v158
    %v175 = vsub.f32 %v126, %v159
    %v176 = vsub.f32 %v127, %v160
    %v177 = vsub.f32 %v128, %v161
    %v178 = vsub.f32 %v129, %v162
    %v179 = vsub.f32 %v130, %v163
    %v180 = vsub.f32 %v131, %v164
    %v181 = vsub.f32 %v132, %v165
    %v182 = vsub.f32 %v133, %v166
    %v183 = vsub.f32 %v134, %v167
    %v184 = vsub.f32 %v135, %v168
    %v185 = vmul.f32 %v169, 1.442695
    %v186 = vpow.pop %v185
    %v187 = vmul.f32 %v170, 1.442695
    %v188 = vpow.pop %v187
    %v189 = vmul.f32 %v171, 1.442695
    %v190 = vpow.pop %v189
    %v191 = vmul.f32 %v172, 1.442695
    %v192 = vpow.pop %v191
    %v193 = vmul.f32 %v173, 1.442695
    %v194 = vpow.pop %v193
    %v195 = vmul.f32 %v174, 1.442695
    %v196 = vpow.pop %v195
    %v197 = vmul.f32 %v175, 1.442695
    %v198 = vpow.pop %v197
    %v199 = vmul.f32 %v176, 1.442695
    %v200 = vpow.pop %v199
    %v201 = vmul.f32 %v177, 1.442695
    %v202 = vpow.pop %v201
    %v203 = vmul.f32 %v178, 1.442695
    %v204 = vpow.pop %v203
    %v205 = vmul.f32 %v179, 1.442695
    %v206 = vpow.pop %v205
    %v207 = vmul.f32 %v180, 1.442695
    %v208 = vpow.pop %v207
    %v209 = vmul.f32 %v181, 1.442695
    %v210 = vpow.pop %v209
    %v211 = vmul.f32 %v182, 1.442695
    %v212 = vpow.pop %v211
    %v213 = vmul.f32 %v183, 1.442695
    %v214 = vpow.pop %v213
    %v215 = vmul.f32 %v184, 1.442695
    %v216 = vpow.pop %v215
    %v217 = vsub.f32 %v137, %v153
    %v218 = vsub.f32 %v138, %v154
    %v219 = vsub.f32 %v139, %v155
    %v220 = vsub.f32 %v140, %v156
    %v221 = vsub.f32 %v141, %v157
    %v222 = vsub.f32 %v142, %v158
    %v223 = vsub.f32 %v143, %v159
    %v224 = vsub.f32 %v144, %v160
    %v225 = vsub.f32 %v145, %v161
    %v226 = vsub.f32 %v146, %v162
    %v227 = vsub.f32 %v147, %v163
    %v228 = vsub.f32 %v148, %v164
    %v229 = vsub.f32 %v149, %v165
    %v230 = vsub.f32 %v150, %v166
    %v231 = vsub.f32 %v151, %v167
    %v232 = vsub.f32 %v152, %v168
    %v233 = vmul.f32 %v217, 1.442695
    %v234 = vpow.pop %v233
    %v235 = vmul.f32 %v218, 1.442695
    %v236 = vpow.pop %v235
    %v237 = vmul.f32 %v219, 1.442695
    %v238 = vpow.pop %v237
    %v239 = vmul.f32 %v220, 1.442695
    %v240 = vpow.pop %v239
    %v241 = vmul.f32 %v221, 1.442695
    %v242 = vpow.pop %v241
    %v243 = vmul.f32 %v222, 1.442695
    %v244 = vpow.pop %v243
    %v245 = vmul.f32 %v223, 1.442695
    %v246 = vpow.pop %v245
    %v247 = vmul.f32 %v224, 1.442695
    %v248 = vpow.pop %v247
    %v249 = vmul.f32 %v225, 1.442695
    %v250 = vpow.pop %v249
    %v251 = vmul.f32 %v226, 1.442695
    %v252 = vpow.pop %v251
    %v253 = vmul.f32 %v227, 1.442695
    %v254 = vpow.pop %v253
    %v255 = vmul.f32 %v228, 1.442695
    %v256 = vpow.pop %v255
    %v257 = vmul.f32 %v229, 1.442695
    %v258 = vpow.pop %v257
    %v259 = vmul.f32 %v230, 1.442695
    %v260 = vpow.pop %v259
    %v261 = vmul.f32 %v231, 1.442695
    %v262 = vpow.pop %v261
    %v263 = vmul.f32 %v232, 1.442695
    %v264 = vpow.pop %v263
    %v265 = vadd.f32 %v186, %v234
    %v266 = vadd.f32 %v188, %v236
    %v267 = vadd.f32 %v190, %v238
    %v268 = vadd.f32 %v192, %v240
    %v269 = vadd.f32 %v194, %v242
    %v270 = vadd.f32 %v196, %v244
    %v271 = vadd.f32 %v198, %v246
    %v272 = vadd.f32 %v200, %v248
    %v273 = vadd.f32 %v202, %v250
    %v274 = vadd.f32 %v204, %v252
    %v275 = vadd.f32 %v206, %v254
    %v276 = vadd.f32 %v208, %v256
    %v277 = vadd.f32 %v210, %v258
    %v278 = vadd.f32 %v212, %v260
    %v279 = vadd.f32 %v214, %v262
    %v280 = vadd.f32 %v216, %v264
    %v281 = vlog2.pop %v265
    %v282 = vmul.f32 %v281, 0.6931472
    %v283 = vlog2.pop %v266
    %v284 = vmul.f32 %v283, 0.6931472
    %v285 = vlog2.pop %v267
    %v286 = vmul.f32 %v285, 0.6931472
    %v287 = vlog2.pop %v268
    %v288 = vmul.f32 %v287, 0.6931472
    %v289 = vlog2.pop %v269
    %v290 = vmul.f32 %v289, 0.6931472
    %v291 = vlog2.pop %v270
    %v292 = vmul.f32 %v291, 0.6931472
    %v293 = vlog2.pop %v271
    %v294 = vmul.f32 %v293, 0.6931472
    %v295 = vlog2.pop %v272
    %v296 = vmul.f32 %v295, 0.6931472
    %v297 = vlog2.pop %v273
    %v298 = vmul.f32 %v297, 0.6931472
    %v299 = vlog2.pop %v274
    %v300 = vmul.f32 %v299, 0.6931472
    %v301 = vlog2.pop %v275
    %v302 = vmul.f32 %v301, 0.6931472
    %v303 = vlog2.pop %v276
    %v304 = vmul.f32 %v303, 0.6931472
    %v305 = vlog2.pop %v277
    %v306 = vmul.f32 %v305, 0.6931472
    %v307 = vlog2.pop %v278
    %v308 = vmul.f32 %v307, 0.6931472
    %v309 = vlog2.pop %v279
    %v310 = vmul.f32 %v309, 0.6931472
    %v311 = vlog2.pop %v280
    %v312 = vmul.f32 %v311, 0.6931472
    %v313 = vadd.f32 %v153, %v282
    %v314 = vadd.f32 %v154, %v284
    %v315 = vadd.f32 %v155, %v286
    %v316 = vadd.f32 %v156, %v288
    %v317 = vadd.f32 %v157, %v290
    %v318 = vadd.f32 %v158, %v292
    %v319 = vadd.f32 %v159, %v294
    %v320 = vadd.f32 %v160, %v296
    %v321 = vadd.f32 %v161, %v298
    %v322 = vadd.f32 %v162, %v300
    %v323 = vadd.f32 %v163, %v302
    %v324 = vadd.f32 %v164, %v304
    %v325 = vadd.f32 %v165, %v306
    %v326 = vadd.f32 %v166, %v308
    %v327 = vadd.f32 %v167, %v310
    %v328 = vadd.f32 %v168, %v312
    %v329 = vrcp.pop %v265
    %v330 = vmul.f32 1.0, %v329
    %v331 = vrcp.pop %v266
    %v332 = vmul.f32 1.0, %v331
    %v333 = vrcp.pop %v267
    %v334 = vmul.f32 1.0, %v333
    %v335 = vrcp.pop %v268
    %v336 = vmul.f32 1.0, %v335
    %v337 = vrcp.pop %v269
    %v338 = vmul.f32 1.0, %v337
    %v339 = vrcp.pop %v270
    %v340 = vmul.f32 1.0, %v339
    %v341 = vrcp.pop %v271
    %v342 = vmul.f32 1.0, %v341
    %v343 = vrcp.pop %v272
    %v344 = vmul.f32 1.0, %v343
    %v345 = vrcp.pop %v273
    %v346 = vmul.f32 1.0, %v345
    %v347 = vrcp.pop %v274
    %v348 = vmul.f32 1.0, %v347
    %v349 = vrcp.pop %v275
    %v350 = vmul.f32 1.0, %v349
    %v351 = vrcp.pop %v276
    %v352 = vmul.f32 1.0, %v351
    %v353 = vrcp.pop %v277
    %v354 = vmul.f32 1.0, %v353
    %v355 = vrcp.pop %v278
    %v356 = vmul.f32 1.0, %v355
    %v357 = vrcp.pop %v279
    %v358 = vmul.f32 1.0, %v357
    %v359 = vrcp.pop %v280
    %v360 = vmul.f32 1.0, %v359
    %vm361 = vcmp.eq.f32.partialorder %v56, 0.0
    %vm362 = vcmp.eq.f32.partialorder %v57, 0.0
    %vm363 = vcmp.eq.f32.partialorder %v58, 0.0
    %vm364 = vcmp.eq.f32.partialorder %v59, 0.0
    %vm365 = vcmp.eq.f32.partialorder %v60, 0.0
    %vm366 = vcmp.eq.f32.partialorder %v61, 0.0
    %vm367 = vcmp.eq.f32.partialorder %v62, 0.0
    %vm368 = vcmp.eq.f32.partialorder %v63, 0.0
    %vm369 = vcmp.eq.f32.partialorder %v64, 0.0
    %vm370 = vcmp.eq.f32.partialorder %v65, 0.0
    %vm371 = vcmp.eq.f32.partialorder %v66, 0.0
    %vm372 = vcmp.eq.f32.partialorder %v67, 0.0
    %vm373 = vcmp.eq.f32.partialorder %v68, 0.0
    %vm374 = vcmp.eq.f32.partialorder %v69, 0.0
    %vm375 = vcmp.eq.f32.partialorder %v70, 0.0
    %vm376 = vcmp.eq.f32.partialorder %v71, 0.0
    %v377 = vsel %vm361, 1, 0
    %v378 = vsel %vm362, 1, 0
    %v379 = vsel %vm363, 1, 0
    %v380 = vsel %vm364, 1, 0
    %v381 = vsel %vm365, 1, 0
    %v382 = vsel %vm366, 1, 0
    %v383 = vsel %vm367, 1, 0
    %v384 = vsel %vm368, 1, 0
    %v385 = vsel %vm369, 1, 0
    %v386 = vsel %vm370, 1, 0
    %v387 = vsel %vm371, 1, 0
    %v388 = vsel %vm372, 1, 0
    %v389 = vsel %vm373, 1, 0
    %v390 = vsel %vm374, 1, 0
    %v391 = vsel %vm375, 1, 0
    %v392 = vsel %vm376, 1, 0
    %v393 = vcvt.s32.f32 %v377
    %v394 = vcvt.s32.f32 %v378
    %v395 = vcvt.s32.f32 %v379
    %v396 = vcvt.s32.f32 %v380
    %v397 = vcvt.s32.f32 %v381
    %v398 = vcvt.s32.f32 %v382
    %v399 = vcvt.s32.f32 %v383
    %v400 = vcvt.s32.f32 %v384
    %v401 = vcvt.s32.f32 %v385
    %v402 = vcvt.s32.f32 %v386
    %v403 = vcvt.s32.f32 %v387
    %v404 = vcvt.s32.f32 %v388
    %v405 = vcvt.s32.f32 %v389
    %v406 = vcvt.s32.f32 %v390
    %v407 = vcvt.s32.f32 %v391
    %v408 = vcvt.s32.f32 %v392
    %v409 = vmul.f32 %v186, %v330
    %v410 = vmul.f32 %v188, %v332
    %v411 = vmul.f32 %v190, %v334
    %v412 = vmul.f32 %v192, %v336
    %v413 = vmul.f32 %v194, %v338
    %v414 = vmul.f32 %v196, %v340
    %v415 = vmul.f32 %v198, %v342
    %v416 = vmul.f32 %v200, %v344
    %v417 = vmul.f32 %v202, %v346
    %v418 = vmul.f32 %v204, %v348
    %v419 = vmul.f32 %v206, %v350
    %v420 = vmul.f32 %v208, %v352
    %v421 = vmul.f32 %v210, %v354
    %v422 = vmul.f32 %v212, %v356
    %v423 = vmul.f32 %v214, %v358
    %v424 = vmul.f32 %v216, %v360
    %v425 = vsub.f32 %v313, %v120
    %v426 = vsub.f32 %v314, %v121
    %v427 = vsub.f32 %v315, %v122
    %v428 = vsub.f32 %v316, %v123
    %v429 = vsub.f32 %v317, %v124
    %v430 = vsub.f32 %v318, %v125
    %v431 = vsub.f32 %v319, %v126
    %v432 = vsub.f32 %v320, %v127
    %v433 = vsub.f32 %v321, %v128
    %v434 = vsub.f32 %v322, %v129
    %v435 = vsub.f32 %v323, %v130
    %v436 = vsub.f32 %v324, %v131
    %v437 = vsub.f32 %v325, %v132
    %v438 = vsub.f32 %v326, %v133
    %v439 = vsub.f32 %v327, %v134
    %v440 = vsub.f32 %v328, %v135
    %v441 = vld [vmem:[#allocation2] sm:$0xf]
    %v442 = vadd.f32 %v393, %v397
    %v443 = vadd.f32 %v442, %v401
    %v444 = vadd.f32 %v443, %v405
    %v445 = vrot.slane %v444, 4
    %v446 = vadd.f32 %v444, %v445
    %v447 = vrot.slane %v446, 2
    %v448 = vadd.f32 %v446, %v447
    %v449 = vrot.slane %v448, 1
    %v450 = vadd.f32 %v448, %v449
    %v451 = vadd.f32 %v394, %v398
    %v452 = vadd.f32 %v451, %v402
    %v453 = vadd.f32 %v452, %v406
    %v454 = vrot.slane %v453, 4
    %v455 = vadd.f32 %v453, %v454
    %v456 = vrot.slane %v455, 2
    %v457 = vadd.f32 %v455, %v456
    %v458 = vrot.slane %v457, 1
    %v459 = vadd.f32 %v457, %v458
    %v460 = vadd.f32 %v395, %v399
    %v461 = vadd.f32 %v460, %v403
    %v462 = vadd.f32 %v461, %v407
    %v463 = vrot.slane %v462, 4
    %v464 = vadd.f32 %v462, %v463
    %v465 = vrot.slane %v464, 2
    %v466 = vadd.f32 %v464, %v465
    %v467 = vrot.slane %v466, 1
    %v468 = vadd.f32 %v466, %v467
    %v469 = vadd.f32 %v396, %v400
    %v470 = vadd.f32 %v469, %v404
    %v471 = vadd.f32 %v470, %v408
    %v472 = vrot.slane %v471, 4
    %v473 = vadd.f32 %v471, %v472
    %v474 = vrot.slane %v473, 2
    %v475 = vadd.f32 %v473, %v474
    %v476 = vrot.slane %v475, 1
    %v477 = vadd.f32 %v475, %v476
    %v482 = vcombine.low %v450, %v459
    %v483 = vcombine.low %v468, %v477
    %v485 = vunpack.c.l.s4 1966171168
    %v486 = vunpack.c.0.s8 %v485
    %v487 = vlaneseq
    %v488 = vshrl.u32 %v487, 7
    %v489 = vsub.s32 %v486, %v488
    %v490 = vrot.slane %v482, %v489
    %v492 = vunpack.c.l.s4 1966171168
    %v493 = vunpack.c.0.s8 %v492
    %v494 = vlaneseq
    %v495 = vshrl.u32 %v494, 7
    %v496 = vsub.s32 %v493, %v495
    %v497 = vrot.slane %v483, %v496
    %v498 = vcombine.low %v490, %v497
    %v500 = vunpack.c.l.s4 1966171168
    %v501 = vunpack.c.0.s8 %v500
    %v502 = vlaneseq
    %v503 = vshrl.u32 %v502, 7
    %v504 = vsub.s32 %v501, %v503
    %v505 = vrot.slane %v498, %v504
    %v507 = vadd.f32 %v441, %v505
    %v508 = vlaneseq
    %vm509 = vcmp.ge.s32.totalorder %v508, 0
    %vm510 = vcmp.lt.s32.totalorder %v508, 512
    %vm511 = vmand %vm509, %vm510
    %512 = vst.msk [vmem:[#allocation2] sm:$0xf] %vm511, %v507
    %s513 = scalar_lea.vmem [#allocation2], 8
    %v514 = vld [vmem:[%s513] sm:$0xf]
    %v515 = vmul.f32 %v393, %v425
    %v516 = vmul.f32 %v394, %v426
    %v517 = vmul.f32 %v395, %v427
    %v518 = vmul.f32 %v396, %v428
    %v519 = vmul.f32 %v397, %v429
    %v520 = vmul.f32 %v398, %v430
    %v521 = vmul.f32 %v399, %v431
    %v522 = vmul.f32 %v400, %v432
    %v523 = vmul.f32 %v401, %v433
    %v524 = vmul.f32 %v402, %v434
    %v525 = vmul.f32 %v403, %v435
    %v526 = vmul.f32 %v404, %v436
    %v527 = vmul.f32 %v405, %v437
    %v528 = vmul.f32 %v406, %v438
    %v529 = vmul.f32 %v407, %v439
    %v530 = vmul.f32 %v408, %v440
    %v531 = vadd.f32 %v515, %v519
    %v532 = vadd.f32 %v531, %v523
    %v533 = vadd.f32 %v532, %v527
    %v534 = vrot.slane %v533, 4
    %v535 = vadd.f32 %v533, %v534
    %v536 = vrot.slane %v535, 2
    %v537 = vadd.f32 %v535, %v536
    %v538 = vrot.slane %v537, 1
    %v539 = vadd.f32 %v537, %v538
    %v540 = vadd.f32 %v516, %v520
    %v541 = vadd.f32 %v540, %v524
    %v542 = vadd.f32 %v541, %v528
    %v543 = vrot.slane %v542, 4
    %v544 = vadd.f32 %v542, %v543
    %v545 = vrot.slane %v544, 2
    %v546 = vadd.f32 %v544, %v545
    %v547 = vrot.slane %v546, 1
    %v548 = vadd.f32 %v546, %v547
    %v549 = vadd.f32 %v517, %v521
    %v550 = vadd.f32 %v549, %v525
    %v551 = vadd.f32 %v550, %v529
    %v552 = vrot.slane %v551, 4
    %v553 = vadd.f32 %v551, %v552
    %v554 = vrot.slane %v553, 2
    %v555 = vadd.f32 %v553, %v554
    %v556 = vrot.slane %v555, 1
    %v557 = vadd.f32 %v555, %v556
    %v558 = vadd.f32 %v518, %v522
    %v559 = vadd.f32 %v558, %v526
    %v560 = vadd.f32 %v559, %v530
    %v561 = vrot.slane %v560, 4
    %v562 = vadd.f32 %v560, %v561
    %v563 = vrot.slane %v562, 2
    %v564 = vadd.f32 %v562, %v563
    %v565 = vrot.slane %v564, 1
    %v566 = vadd.f32 %v564, %v565
    %v571 = vcombine.low %v539, %v548
    %v572 = vcombine.low %v557, %v566
    %v574 = vunpack.c.l.s4 1966171168
    %v575 = vunpack.c.0.s8 %v574
    %v576 = vlaneseq
    %v577 = vshrl.u32 %v576, 7
    %v578 = vsub.s32 %v575, %v577
    %v579 = vrot.slane %v571, %v578
    %v581 = vunpack.c.l.s4 1966171168
    %v582 = vunpack.c.0.s8 %v581
    %v583 = vlaneseq
    %v584 = vshrl.u32 %v583, 7
    %v585 = vsub.s32 %v582, %v584
    %v586 = vrot.slane %v572, %v585
    %v587 = vcombine.low %v579, %v586
    %v589 = vunpack.c.l.s4 1966171168
    %v590 = vunpack.c.0.s8 %v589
    %v591 = vlaneseq
    %v592 = vshrl.u32 %v591, 7
    %v593 = vsub.s32 %v590, %v592
    %v594 = vrot.slane %v587, %v593
    %v596 = vadd.f32 %v514, %v594
    %597 = vst.msk [vmem:[%s513] sm:$0xf] %vm511, %v596
    %s598 = scalar_lea.vmem [#allocation2], 16
    %v599 = vld [vmem:[%s598] sm:$0xf]
    %v600 = vmul.f32 %v393, %v409
    %v601 = vmul.f32 %v394, %v410
    %v602 = vmul.f32 %v395, %v411
    %v603 = vmul.f32 %v396, %v412
    %v604 = vmul.f32 %v397, %v413
    %v605 = vmul.f32 %v398, %v414
    %v606 = vmul.f32 %v399, %v415
    %v607 = vmul.f32 %v400, %v416
    %v608 = vmul.f32 %v401, %v417
    %v609 = vmul.f32 %v402, %v418
    %v610 = vmul.f32 %v403, %v419
    %v611 = vmul.f32 %v404, %v420
    %v612 = vmul.f32 %v405, %v421
    %v613 = vmul.f32 %v406, %v422
    %v614 = vmul.f32 %v407, %v423
    %v615 = vmul.f32 %v408, %v424
    %v616 = vadd.f32 %v600, %v604
    %v617 = vadd.f32 %v616, %v608
    %v618 = vadd.f32 %v617, %v612
    %v619 = vrot.slane %v618, 4
    %v620 = vadd.f32 %v618, %v619
    %v621 = vrot.slane %v620, 2
    %v622 = vadd.f32 %v620, %v621
    %v623 = vrot.slane %v622, 1
    %v624 = vadd.f32 %v622, %v623
    %v625 = vadd.f32 %v601, %v605
    %v626 = vadd.f32 %v625, %v609
    %v627 = vadd.f32 %v626, %v613
    %v628 = vrot.slane %v627, 4
    %v629 = vadd.f32 %v627, %v628
    %v630 = vrot.slane %v629, 2
    %v631 = vadd.f32 %v629, %v630
    %v632 = vrot.slane %v631, 1
    %v633 = vadd.f32 %v631, %v632
    %v634 = vadd.f32 %v602, %v606
    %v635 = vadd.f32 %v634, %v610
    %v636 = vadd.f32 %v635, %v614
    %v637 = vrot.slane %v636, 4
    %v638 = vadd.f32 %v636, %v637
    %v639 = vrot.slane %v638, 2
    %v640 = vadd.f32 %v638, %v639
    %v641 = vrot.slane %v640, 1
    %v642 = vadd.f32 %v640, %v641
    %v643 = vadd.f32 %v603, %v607
    %v644 = vadd.f32 %v643, %v611
    %v645 = vadd.f32 %v644, %v615
    %v646 = vrot.slane %v645, 4
    %v647 = vadd.f32 %v645, %v646
    %v648 = vrot.slane %v647, 2
    %v649 = vadd.f32 %v647, %v648
    %v650 = vrot.slane %v649, 1
    %v651 = vadd.f32 %v649, %v650
    %v656 = vcombine.low %v624, %v633
    %v657 = vcombine.low %v642, %v651
    %v659 = vunpack.c.l.s4 1966171168
    %v660 = vunpack.c.0.s8 %v659
    %v661 = vlaneseq
    %v662 = vshrl.u32 %v661, 7
    %v663 = vsub.s32 %v660, %v662
    %v664 = vrot.slane %v656, %v663
    %v666 = vunpack.c.l.s4 1966171168
    %v667 = vunpack.c.0.s8 %v666
    %v668 = vlaneseq
    %v669 = vshrl.u32 %v668, 7
    %v670 = vsub.s32 %v667, %v669
    %v671 = vrot.slane %v657, %v670
    %v672 = vcombine.low %v664, %v671
    %v674 = vunpack.c.l.s4 1966171168
    %v675 = vunpack.c.0.s8 %v674
    %v676 = vlaneseq
    %v677 = vshrl.u32 %v676, 7
    %v678 = vsub.s32 %v675, %v677
    %v679 = vrot.slane %v672, %v678
    %v681 = vadd.f32 %v599, %v679
    %682 = vst.msk [vmem:[%s598] sm:$0xf] %vm511, %v681
    %s683 = scalar_lea.vmem [#allocation2], 24
    %v684 = vld [vmem:[%s683] sm:$0xf]
    %v685 = vmul.f32 %v409, %v104
    %v686 = vmul.f32 %v410, %v105
    %v687 = vmul.f32 %v411, %v106
    %v688 = vmul.f32 %v412, %v107
    %v689 = vmul.f32 %v413, %v108
    %v690 = vmul.f32 %v414, %v109
    %v691 = vmul.f32 %v415, %v110
    %v692 = vmul.f32 %v416, %v111
    %v693 = vmul.f32 %v417, %v112
    %v694 = vmul.f32 %v418, %v113
    %v695 = vmul.f32 %v419, %v114
    %v696 = vmul.f32 %v420, %v115
    %v697 = vmul.f32 %v421, %v116
    %v698 = vmul.f32 %v422, %v117
    %v699 = vmul.f32 %v423, %v118
    %v700 = vmul.f32 %v424, %v119
    %v701 = vadd.f32 %v685, %v689
    %v702 = vadd.f32 %v701, %v693
    %v703 = vadd.f32 %v702, %v697
    %v704 = vrot.slane %v703, 4
    %v705 = vadd.f32 %v703, %v704
    %v706 = vrot.slane %v705, 2
    %v707 = vadd.f32 %v705, %v706
    %v708 = vrot.slane %v707, 1
    %v709 = vadd.f32 %v707, %v708
    %v710 = vadd.f32 %v686, %v690
    %v711 = vadd.f32 %v710, %v694
    %v712 = vadd.f32 %v711, %v698
    %v713 = vrot.slane %v712, 4
    %v714 = vadd.f32 %v712, %v713
    %v715 = vrot.slane %v714, 2
    %v716 = vadd.f32 %v714, %v715
    %v717 = vrot.slane %v716, 1
    %v718 = vadd.f32 %v716, %v717
    %v719 = vadd.f32 %v687, %v691
    %v720 = vadd.f32 %v719, %v695
    %v721 = vadd.f32 %v720, %v699
    %v722 = vrot.slane %v721, 4
    %v723 = vadd.f32 %v721, %v722
    %v724 = vrot.slane %v723, 2
    %v725 = vadd.f32 %v723, %v724
    %v726 = vrot.slane %v725, 1
    %v727 = vadd.f32 %v725, %v726
    %v728 = vadd.f32 %v688, %v692
    %v729 = vadd.f32 %v728, %v696
    %v730 = vadd.f32 %v729, %v700
    %v731 = vrot.slane %v730, 4
    %v732 = vadd.f32 %v730, %v731
    %v733 = vrot.slane %v732, 2
    %v734 = vadd.f32 %v732, %v733
    %v735 = vrot.slane %v734, 1
    %v736 = vadd.f32 %v734, %v735
    %v741 = vcombine.low %v709, %v718
    %v742 = vcombine.low %v727, %v736
    %v744 = vunpack.c.l.s4 1966171168
    %v745 = vunpack.c.0.s8 %v744
    %v746 = vlaneseq
    %v747 = vshrl.u32 %v746, 7
    %v748 = vsub.s32 %v745, %v747
    %v749 = vrot.slane %v741, %v748
    %v751 = vunpack.c.l.s4 1966171168
    %v752 = vunpack.c.0.s8 %v751
    %v753 = vlaneseq
    %v754 = vshrl.u32 %v753, 7
    %v755 = vsub.s32 %v752, %v754
    %v756 = vrot.slane %v742, %v755
    %v757 = vcombine.low %v749, %v756
    %v759 = vunpack.c.l.s4 1966171168
    %v760 = vunpack.c.0.s8 %v759
    %v761 = vlaneseq
    %v762 = vshrl.u32 %v761, 7
    %v763 = vsub.s32 %v760, %v762
    %v764 = vrot.slane %v757, %v763
    %v766 = vadd.f32 %v684, %v764
    %767 = vst.msk [vmem:[%s683] sm:$0xf] %vm511, %v766
    %vm768 = vcmp.eq.f32.partialorder %v56, 1.0
    %vm769 = vcmp.eq.f32.partialorder %v57, 1.0
    %vm770 = vcmp.eq.f32.partialorder %v58, 1.0
    %vm771 = vcmp.eq.f32.partialorder %v59, 1.0
    %vm772 = vcmp.eq.f32.partialorder %v60, 1.0
    %vm773 = vcmp.eq.f32.partialorder %v61, 1.0
    %vm774 = vcmp.eq.f32.partialorder %v62, 1.0
    %vm775 = vcmp.eq.f32.partialorder %v63, 1.0
    %vm776 = vcmp.eq.f32.partialorder %v64, 1.0
    %vm777 = vcmp.eq.f32.partialorder %v65, 1.0
    %vm778 = vcmp.eq.f32.partialorder %v66, 1.0
    %vm779 = vcmp.eq.f32.partialorder %v67, 1.0
    %vm780 = vcmp.eq.f32.partialorder %v68, 1.0
    %vm781 = vcmp.eq.f32.partialorder %v69, 1.0
    %vm782 = vcmp.eq.f32.partialorder %v70, 1.0
    %vm783 = vcmp.eq.f32.partialorder %v71, 1.0
    %v784 = vsel %vm768, 1, 0
    %v785 = vsel %vm769, 1, 0
    %v786 = vsel %vm770, 1, 0
    %v787 = vsel %vm771, 1, 0
    %v788 = vsel %vm772, 1, 0
    %v789 = vsel %vm773, 1, 0
    %v790 = vsel %vm774, 1, 0
    %v791 = vsel %vm775, 1, 0
    %v792 = vsel %vm776, 1, 0
    %v793 = vsel %vm777, 1, 0
    %v794 = vsel %vm778, 1, 0
    %v795 = vsel %vm779, 1, 0
    %v796 = vsel %vm780, 1, 0
    %v797 = vsel %vm781, 1, 0
    %v798 = vsel %vm782, 1, 0
    %v799 = vsel %vm783, 1, 0
    %v800 = vcvt.s32.f32 %v784
    %v801 = vcvt.s32.f32 %v785
    %v802 = vcvt.s32.f32 %v786
    %v803 = vcvt.s32.f32 %v787
    %v804 = vcvt.s32.f32 %v788
    %v805 = vcvt.s32.f32 %v789
    %v806 = vcvt.s32.f32 %v790
    %v807 = vcvt.s32.f32 %v791
    %v808 = vcvt.s32.f32 %v792
    %v809 = vcvt.s32.f32 %v793
    %v810 = vcvt.s32.f32 %v794
    %v811 = vcvt.s32.f32 %v795
    %v812 = vcvt.s32.f32 %v796
    %v813 = vcvt.s32.f32 %v797
    %v814 = vcvt.s32.f32 %v798
    %v815 = vcvt.s32.f32 %v799
    %v816 = vmul.f32 %v234, %v330
    %v817 = vmul.f32 %v236, %v332
    %v818 = vmul.f32 %v238, %v334
    %v819 = vmul.f32 %v240, %v336
    %v820 = vmul.f32 %v242, %v338
    %v821 = vmul.f32 %v244, %v340
    %v822 = vmul.f32 %v246, %v342
    %v823 = vmul.f32 %v248, %v344
    %v824 = vmul.f32 %v250, %v346
    %v825 = vmul.f32 %v252, %v348
    %v826 = vmul.f32 %v254, %v350
    %v827 = vmul.f32 %v256, %v352
    %v828 = vmul.f32 %v258, %v354
    %v829 = vmul.f32 %v260, %v356
    %v830 = vmul.f32 %v262, %v358
    %v831 = vmul.f32 %v264, %v360
    %v832 = vsub.f32 %v313, %v137
    %v833 = vsub.f32 %v314, %v138
    %v834 = vsub.f32 %v315, %v139
    %v835 = vsub.f32 %v316, %v140
    %v836 = vsub.f32 %v317, %v141
    %v837 = vsub.f32 %v318, %v142
    %v838 = vsub.f32 %v319, %v143
    %v839 = vsub.f32 %v320, %v144
    %v840 = vsub.f32 %v321, %v145
    %v841 = vsub.f32 %v322, %v146
    %v842 = vsub.f32 %v323, %v147
    %v843 = vsub.f32 %v324, %v148
    %v844 = vsub.f32 %v325, %v149
    %v845 = vsub.f32 %v326, %v150
    %v846 = vsub.f32 %v327, %v151
    %v847 = vsub.f32 %v328, %v152
    %s848 = scalar_lea.vmem [#allocation2], 4
    %v849 = vld [vmem:[%s848] sm:$0xf]
    %v850 = vadd.f32 %v800, %v804
    %v851 = vadd.f32 %v850, %v808
    %v852 = vadd.f32 %v851, %v812
    %v853 = vrot.slane %v852, 4
    %v854 = vadd.f32 %v852, %v853
    %v855 = vrot.slane %v854, 2
    %v856 = vadd.f32 %v854, %v855
    %v857 = vrot.slane %v856, 1
    %v858 = vadd.f32 %v856, %v857
    %v859 = vadd.f32 %v801, %v805
    %v860 = vadd.f32 %v859, %v809
    %v861 = vadd.f32 %v860, %v813
    %v862 = vrot.slane %v861, 4
    %v863 = vadd.f32 %v861, %v862
    %v864 = vrot.slane %v863, 2
    %v865 = vadd.f32 %v863, %v864
    %v866 = vrot.slane %v865, 1
    %v867 = vadd.f32 %v865, %v866
    %v868 = vadd.f32 %v802, %v806
    %v869 = vadd.f32 %v868, %v810
    %v870 = vadd.f32 %v869, %v814
    %v871 = vrot.slane %v870, 4
    %v872 = vadd.f32 %v870, %v871
    %v873 = vrot.slane %v872, 2
    %v874 = vadd.f32 %v872, %v873
    %v875 = vrot.slane %v874, 1
    %v876 = vadd.f32 %v874, %v875
    %v877 = vadd.f32 %v803, %v807
    %v878 = vadd.f32 %v877, %v811
    %v879 = vadd.f32 %v878, %v815
    %v880 = vrot.slane %v879, 4
    %v881 = vadd.f32 %v879, %v880
    %v882 = vrot.slane %v881, 2
    %v883 = vadd.f32 %v881, %v882
    %v884 = vrot.slane %v883, 1
    %v885 = vadd.f32 %v883, %v884
    %v890 = vcombine.low %v858, %v867
    %v891 = vcombine.low %v876, %v885
    %v893 = vunpack.c.l.s4 1966171168
    %v894 = vunpack.c.0.s8 %v893
    %v895 = vlaneseq
    %v896 = vshrl.u32 %v895, 7
    %v897 = vsub.s32 %v894, %v896
    %v898 = vrot.slane %v890, %v897
    %v900 = vunpack.c.l.s4 1966171168
    %v901 = vunpack.c.0.s8 %v900
    %v902 = vlaneseq
    %v903 = vshrl.u32 %v902, 7
    %v904 = vsub.s32 %v901, %v903
    %v905 = vrot.slane %v891, %v904
    %v906 = vcombine.low %v898, %v905
    %v908 = vunpack.c.l.s4 1966171168
    %v909 = vunpack.c.0.s8 %v908
    %v910 = vlaneseq
    %v911 = vshrl.u32 %v910, 7
    %v912 = vsub.s32 %v909, %v911
    %v913 = vrot.slane %v906, %v912
    %v915 = vadd.f32 %v849, %v913
    %916 = vst.msk [vmem:[%s848] sm:$0xf] %vm511, %v915
    %s917 = scalar_lea.vmem [#allocation2], 12
    %v918 = vld [vmem:[%s917] sm:$0xf]
    %v919 = vmul.f32 %v800, %v832
    %v920 = vmul.f32 %v801, %v833
    %v921 = vmul.f32 %v802, %v834
    %v922 = vmul.f32 %v803, %v835
    %v923 = vmul.f32 %v804, %v836
    %v924 = vmul.f32 %v805, %v837
    %v925 = vmul.f32 %v806, %v838
    %v926 = vmul.f32 %v807, %v839
    %v927 = vmul.f32 %v808, %v840
    %v928 = vmul.f32 %v809, %v841
    %v929 = vmul.f32 %v810, %v842
    %v930 = vmul.f32 %v811, %v843
    %v931 = vmul.f32 %v812, %v844
    %v932 = vmul.f32 %v813, %v845
    %v933 = vmul.f32 %v814, %v846
    %v934 = vmul.f32 %v815, %v847
    %v935 = vadd.f32 %v919, %v923
    %v936 = vadd.f32 %v935, %v927
    %v937 = vadd.f32 %v936, %v931
    %v938 = vrot.slane %v937, 4
    %v939 = vadd.f32 %v937, %v938
    %v940 = vrot.slane %v939, 2
    %v941 = vadd.f32 %v939, %v940
    %v942 = vrot.slane %v941, 1
    %v943 = vadd.f32 %v941, %v942
    %v944 = vadd.f32 %v920, %v924
    %v945 = vadd.f32 %v944, %v928
    %v946 = vadd.f32 %v945, %v932
    %v947 = vrot.slane %v946, 4
    %v948 = vadd.f32 %v946, %v947
    %v949 = vrot.slane %v948, 2
    %v950 = vadd.f32 %v948, %v949
    %v951 = vrot.slane %v950, 1
    %v952 = vadd.f32 %v950, %v951
    %v953 = vadd.f32 %v921, %v925
    %v954 = vadd.f32 %v953, %v929
    %v955 = vadd.f32 %v954, %v933
    %v956 = vrot.slane %v955, 4
    %v957 = vadd.f32 %v955, %v956
    %v958 = vrot.slane %v957, 2
    %v959 = vadd.f32 %v957, %v958
    %v960 = vrot.slane %v959, 1
    %v961 = vadd.f32 %v959, %v960
    %v962 = vadd.f32 %v922, %v926
    %v963 = vadd.f32 %v962, %v930
    %v964 = vadd.f32 %v963, %v934
    %v965 = vrot.slane %v964, 4
    %v966 = vadd.f32 %v964, %v965
    %v967 = vrot.slane %v966, 2
    %v968 = vadd.f32 %v966, %v967
    %v969 = vrot.slane %v968, 1
    %v970 = vadd.f32 %v968, %v969
    %v975 = vcombine.low %v943, %v952
    %v976 = vcombine.low %v961, %v970
    %v978 = vunpack.c.l.s4 1966171168
    %v979 = vunpack.c.0.s8 %v978
    %v980 = vlaneseq
    %v981 = vshrl.u32 %v980, 7
    %v982 = vsub.s32 %v979, %v981
    %v983 = vrot.slane %v975, %v982
    %v985 = vunpack.c.l.s4 1966171168
    %v986 = vunpack.c.0.s8 %v985
    %v987 = vlaneseq
    %v988 = vshrl.u32 %v987, 7
    %v989 = vsub.s32 %v986, %v988
    %v990 = vrot.slane %v976, %v989
    %v991 = vcombine.low %v983, %v990
    %v993 = vunpack.c.l.s4 1966171168
    %v994 = vunpack.c.0.s8 %v993
    %v995 = vlaneseq
    %v996 = vshrl.u32 %v995, 7
    %v997 = vsub.s32 %v994, %v996
    %v998 = vrot.slane %v991, %v997
    %v1000 = vadd.f32 %v918, %v998
    %1001 = vst.msk [vmem:[%s917] sm:$0xf] %vm511, %v1000
    %s1002 = scalar_lea.vmem [#allocation2], 20
    %v1003 = vld [vmem:[%s1002] sm:$0xf]
    %v1004 = vmul.f32 %v800, %v816
    %v1005 = vmul.f32 %v801, %v817
    %v1006 = vmul.f32 %v802, %v818
    %v1007 = vmul.f32 %v803, %v819
    %v1008 = vmul.f32 %v804, %v820
    %v1009 = vmul.f32 %v805, %v821
    %v1010 = vmul.f32 %v806, %v822
    %v1011 = vmul.f32 %v807, %v823
    %v1012 = vmul.f32 %v808, %v824
    %v1013 = vmul.f32 %v809, %v825
    %v1014 = vmul.f32 %v810, %v826
    %v1015 = vmul.f32 %v811, %v827
    %v1016 = vmul.f32 %v812, %v828
    %v1017 = vmul.f32 %v813, %v829
    %v1018 = vmul.f32 %v814, %v830
    %v1019 = vmul.f32 %v815, %v831
    %v1020 = vadd.f32 %v1004, %v1008
    %v1021 = vadd.f32 %v1020, %v1012
    %v1022 = vadd.f32 %v1021, %v1016
    %v1023 = vrot.slane %v1022, 4
    %v1024 = vadd.f32 %v1022, %v1023
    %v1025 = vrot.slane %v1024, 2
    %v1026 = vadd.f32 %v1024, %v1025
    %v1027 = vrot.slane %v1026, 1
    %v1028 = vadd.f32 %v1026, %v1027
    %v1029 = vadd.f32 %v1005, %v1009
    %v1030 = vadd.f32 %v1029, %v1013
    %v1031 = vadd.f32 %v1030, %v1017
    %v1032 = vrot.slane %v1031, 4
    %v1033 = vadd.f32 %v1031, %v1032
    %v1034 = vrot.slane %v1033, 2
    %v1035 = vadd.f32 %v1033, %v1034
    %v1036 = vrot.slane %v1035, 1
    %v1037 = vadd.f32 %v1035, %v1036
    %v1038 = vadd.f32 %v1006, %v1010
    %v1039 = vadd.f32 %v1038, %v1014
    %v1040 = vadd.f32 %v1039, %v1018
    %v1041 = vrot.slane %v1040, 4
    %v1042 = vadd.f32 %v1040, %v1041
    %v1043 = vrot.slane %v1042, 2
    %v1044 = vadd.f32 %v1042, %v1043
    %v1045 = vrot.slane %v1044, 1
    %v1046 = vadd.f32 %v1044, %v1045
    %v1047 = vadd.f32 %v1007, %v1011
    %v1048 = vadd.f32 %v1047, %v1015
    %v1049 = vadd.f32 %v1048, %v1019
    %v1050 = vrot.slane %v1049, 4
    %v1051 = vadd.f32 %v1049, %v1050
    %v1052 = vrot.slane %v1051, 2
    %v1053 = vadd.f32 %v1051, %v1052
    %v1054 = vrot.slane %v1053, 1
    %v1055 = vadd.f32 %v1053, %v1054
    %v1060 = vcombine.low %v1028, %v1037
    %v1061 = vcombine.low %v1046, %v1055
    %v1063 = vunpack.c.l.s4 1966171168
    %v1064 = vunpack.c.0.s8 %v1063
    %v1065 = vlaneseq
    %v1066 = vshrl.u32 %v1065, 7
    %v1067 = vsub.s32 %v1064, %v1066
    %v1068 = vrot.slane %v1060, %v1067
    %v1070 = vunpack.c.l.s4 1966171168
    %v1071 = vunpack.c.0.s8 %v1070
    %v1072 = vlaneseq
    %v1073 = vshrl.u32 %v1072, 7
    %v1074 = vsub.s32 %v1071, %v1073
    %v1075 = vrot.slane %v1061, %v1074
    %v1076 = vcombine.low %v1068, %v1075
    %v1078 = vunpack.c.l.s4 1966171168
    %v1079 = vunpack.c.0.s8 %v1078
    %v1080 = vlaneseq
    %v1081 = vshrl.u32 %v1080, 7
    %v1082 = vsub.s32 %v1079, %v1081
    %v1083 = vrot.slane %v1076, %v1082
    %v1085 = vadd.f32 %v1003, %v1083
    %1086 = vst.msk [vmem:[%s1002] sm:$0xf] %vm511, %v1085
    %s1087 = scalar_lea.vmem [#allocation2], 28
    %v1088 = vld [vmem:[%s1087] sm:$0xf]
    %v1089 = vmul.f32 %v816, %v104
    %v1090 = vmul.f32 %v817, %v105
    %v1091 = vmul.f32 %v818, %v106
    %v1092 = vmul.f32 %v819, %v107
    %v1093 = vmul.f32 %v820, %v108
    %v1094 = vmul.f32 %v821, %v109
    %v1095 = vmul.f32 %v822, %v110
    %v1096 = vmul.f32 %v823, %v111
    %v1097 = vmul.f32 %v824, %v112
    %v1098 = vmul.f32 %v825, %v113
    %v1099 = vmul.f32 %v826, %v114
    %v1100 = vmul.f32 %v827, %v115
    %v1101 = vmul.f32 %v828, %v116
    %v1102 = vmul.f32 %v829, %v117
    %v1103 = vmul.f32 %v830, %v118
    %v1104 = vmul.f32 %v831, %v119
    %v1105 = vadd.f32 %v1089, %v1093
    %v1106 = vadd.f32 %v1105, %v1097
    %v1107 = vadd.f32 %v1106, %v1101
    %v1108 = vrot.slane %v1107, 4
    %v1109 = vadd.f32 %v1107, %v1108
    %v1110 = vrot.slane %v1109, 2
    %v1111 = vadd.f32 %v1109, %v1110
    %v1112 = vrot.slane %v1111, 1
    %v1113 = vadd.f32 %v1111, %v1112
    %v1114 = vadd.f32 %v1090, %v1094
    %v1115 = vadd.f32 %v1114, %v1098
    %v1116 = vadd.f32 %v1115, %v1102
    %v1117 = vrot.slane %v1116, 4
    %v1118 = vadd.f32 %v1116, %v1117
    %v1119 = vrot.slane %v1118, 2
    %v1120 = vadd.f32 %v1118, %v1119
    %v1121 = vrot.slane %v1120, 1
    %v1122 = vadd.f32 %v1120, %v1121
    %v1123 = vadd.f32 %v1091, %v1095
    %v1124 = vadd.f32 %v1123, %v1099
    %v1125 = vadd.f32 %v1124, %v1103
    %v1126 = vrot.slane %v1125, 4
    %v1127 = vadd.f32 %v1125, %v1126
    %v1128 = vrot.slane %v1127, 2
    %v1129 = vadd.f32 %v1127, %v1128
    %v1130 = vrot.slane %v1129, 1
    %v1131 = vadd.f32 %v1129, %v1130
    %v1132 = vadd.f32 %v1092, %v1096
    %v1133 = vadd.f32 %v1132, %v1100
    %v1134 = vadd.f32 %v1133, %v1104
    %v1135 = vrot.slane %v1134, 4
    %v1136 = vadd.f32 %v1134, %v1135
    %v1137 = vrot.slane %v1136, 2
    %v1138 = vadd.f32 %v1136, %v1137
    %v1139 = vrot.slane %v1138, 1
    %v1140 = vadd.f32 %v1138, %v1139
    %v1145 = vcombine.low %v1113, %v1122
    %v1146 = vcombine.low %v1131, %v1140
    %v1148 = vunpack.c.l.s4 1966171168
    %v1149 = vunpack.c.0.s8 %v1148
    %v1150 = vlaneseq
    %v1151 = vshrl.u32 %v1150, 7
    %v1152 = vsub.s32 %v1149, %v1151
    %v1153 = vrot.slane %v1145, %v1152
    %v1155 = vunpack.c.l.s4 1966171168
    %v1156 = vunpack.c.0.s8 %v1155
    %v1157 = vlaneseq
    %v1158 = vshrl.u32 %v1157, 7
    %v1159 = vsub.s32 %v1156, %v1158
    %v1160 = vrot.slane %v1146, %v1159
    %v1161 = vcombine.low %v1153, %v1160
    %v1163 = vunpack.c.l.s4 1966171168
    %v1164 = vunpack.c.0.s8 %v1163
    %v1165 = vlaneseq
    %v1166 = vshrl.u32 %v1165, 7
    %v1167 = vsub.s32 %v1164, %v1166
    %v1168 = vrot.slane %v1161, %v1167
    %v1170 = vadd.f32 %v1088, %v1168
    %1171 = vst.msk [vmem:[%s1087] sm:$0xf] %vm511, %v1170
    // Predicated region
    $region22: #{tpu_custom_call.1} parent=1 // pred_check
      %p1172 = pneg %p40
    $region23: #{tpu_custom_call.1} parent=1 // pred_check_branch
      %1174 = sbr.rel (%p1172) target = $region25
    $region24: #{tpu_custom_call.1} parent=1 // pred_region
      %v1175 = vld [vmem:[#allocation2] sm:$0xf]
      %v1177 = vlaneseq
      %v1178 = vshrl.u32 %v1177, 7
      %v1179 = vsub.s32 0, %v1178
      %v1180 = vrot.slane %v1175, %v1179
      %v1181 = vlaneseq
      %v1182 = vshrl.u32 %v1181, 7
      %v1183 = vsub.s32 1, %v1182
      %v1184 = vrot.slane %v1175, %v1183
      %v1185 = vlaneseq
      %v1186 = vshrl.u32 %v1185, 7
      %v1187 = vsub.s32 2, %v1186
      %v1188 = vrot.slane %v1175, %v1187
      %v1189 = vlaneseq
      %v1190 = vshrl.u32 %v1189, 7
      %v1191 = vsub.s32 3, %v1190
      %v1192 = vrot.slane %v1175, %v1191
      %vm1197 = vcmask 1040384
      %v1198 = vsel %vm1197, %v1180, 0.0
      %v1199 = vsel %vm1197, %v1184, 0.0
      %v1200 = vadd.f32 %v1198, %v1199
      %v1201 = vsel %vm1197, %v1188, 0.0
      %v1202 = vadd.f32 %v1200, %v1201
      %v1203 = vsel %vm1197, %v1192, 0.0
      %v1204 = vadd.f32 %v1202, %v1203
      %1205 = vadd.xlane.f32.xlu0 %v1204
      %v1206 = vpop.xlane.xlu0 %1205
      %v1207 = vrot.slane %v1206, 4
      %v1208 = vadd.f32 %v1206, %v1207
      %v1209 = vrot.slane %v1208, 2
      %v1210 = vadd.f32 %v1208, %v1209
      %v1211 = vrot.slane %v1210, 1
      %v1212 = vadd.f32 %v1210, %v1211
      %s1213 = vtos %v1212
      %v1214 = vld [vmem:[%s513] sm:$0xf]
      %v1216 = vlaneseq
      %v1217 = vshrl.u32 %v1216, 7
      %v1218 = vsub.s32 0, %v1217
      %v1219 = vrot.slane %v1214, %v1218
      %v1220 = vlaneseq
      %v1221 = vshrl.u32 %v1220, 7
      %v1222 = vsub.s32 1, %v1221
      %v1223 = vrot.slane %v1214, %v1222
      %v1224 = vlaneseq
      %v1225 = vshrl.u32 %v1224, 7
      %v1226 = vsub.s32 2, %v1225
      %v1227 = vrot.slane %v1214, %v1226
      %v1228 = vlaneseq
      %v1229 = vshrl.u32 %v1228, 7
      %v1230 = vsub.s32 3, %v1229
      %v1231 = vrot.slane %v1214, %v1230
      %v1236 = vsel %vm1197, %v1219, 0.0
      %v1237 = vsel %vm1197, %v1223, 0.0
      %v1238 = vadd.f32 %v1236, %v1237
      %v1239 = vsel %vm1197, %v1227, 0.0
      %v1240 = vadd.f32 %v1238, %v1239
      %v1241 = vsel %vm1197, %v1231, 0.0
      %v1242 = vadd.f32 %v1240, %v1241
      %1243 = vadd.xlane.f32.xlu0 %v1242
      %v1244 = vpop.xlane.xlu0 %1243
      %v1245 = vrot.slane %v1244, 4
      %v1246 = vadd.f32 %v1244, %v1245
      %v1247 = vrot.slane %v1246, 2
      %v1248 = vadd.f32 %v1246, %v1247
      %v1249 = vrot.slane %v1248, 1
      %v1250 = vadd.f32 %v1248, %v1249
      %s1251 = vtos %v1250
      %v1252 = vld [vmem:[%s598] sm:$0xf]
      %v1254 = vlaneseq
      %v1255 = vshrl.u32 %v1254, 7
      %v1256 = vsub.s32 0, %v1255
      %v1257 = vrot.slane %v1252, %v1256
      %v1258 = vlaneseq
      %v1259 = vshrl.u32 %v1258, 7
      %v1260 = vsub.s32 1, %v1259
      %v1261 = vrot.slane %v1252, %v1260
      %v1262 = vlaneseq
      %v1263 = vshrl.u32 %v1262, 7
      %v1264 = vsub.s32 2, %v1263
      %v1265 = vrot.slane %v1252, %v1264
      %v1266 = vlaneseq
      %v1267 = vshrl.u32 %v1266, 7
      %v1268 = vsub.s32 3, %v1267
      %v1269 = vrot.slane %v1252, %v1268
      %v1274 = vsel %vm1197, %v1257, 0.0
      %v1275 = vsel %vm1197, %v1261, 0.0
      %v1276 = vadd.f32 %v1274, %v1275
      %v1277 = vsel %vm1197, %v1265, 0.0
      %v1278 = vadd.f32 %v1276, %v1277
      %v1279 = vsel %vm1197, %v1269, 0.0
      %v1280 = vadd.f32 %v1278, %v1279
      %1281 = vadd.xlane.f32.xlu0 %v1280
      %v1282 = vpop.xlane.xlu0 %1281
      %v1283 = vrot.slane %v1282, 4
      %v1284 = vadd.f32 %v1282, %v1283
      %v1285 = vrot.slane %v1284, 2
      %v1286 = vadd.f32 %v1284, %v1285
      %v1287 = vrot.slane %v1286, 1
      %v1288 = vadd.f32 %v1286, %v1287
      %s1289 = vtos %v1288
      %v1290 = vld [vmem:[%s683] sm:$0xf]
      %v1292 = vlaneseq
      %v1293 = vshrl.u32 %v1292, 7
      %v1294 = vsub.s32 0, %v1293
      %v1295 = vrot.slane %v1290, %v1294
      %v1296 = vlaneseq
      %v1297 = vshrl.u32 %v1296, 7
      %v1298 = vsub.s32 1, %v1297
      %v1299 = vrot.slane %v1290, %v1298
      %v1300 = vlaneseq
      %v1301 = vshrl.u32 %v1300, 7
      %v1302 = vsub.s32 2, %v1301
      %v1303 = vrot.slane %v1290, %v1302
      %v1304 = vlaneseq
      %v1305 = vshrl.u32 %v1304, 7
      %v1306 = vsub.s32 3, %v1305
      %v1307 = vrot.slane %v1290, %v1306
      %v1312 = vsel %vm1197, %v1295, 0.0
      %v1313 = vsel %vm1197, %v1299, 0.0
      %v1314 = vadd.f32 %v1312, %v1313
      %v1315 = vsel %vm1197, %v1303, 0.0
      %v1316 = vadd.f32 %v1314, %v1315
      %v1317 = vsel %vm1197, %v1307, 0.0
      %v1318 = vadd.f32 %v1316, %v1317
      %1319 = vadd.xlane.f32.xlu0 %v1318
      %v1320 = vpop.xlane.xlu0 %1319
      %v1321 = vrot.slane %v1320, 4
      %v1322 = vadd.f32 %v1320, %v1321
      %v1323 = vrot.slane %v1322, 2
      %v1324 = vadd.f32 %v1322, %v1323
      %v1325 = vrot.slane %v1324, 1
      %v1326 = vadd.f32 %v1324, %v1325
      %s1327 = vtos %v1326
      %p1328 = scmp.gt.f32.partialorder %s1213, 0.0
      %s1329 = scalar_select %p1328, %s1213, 1.0
      %v1330 = vstv %s1329
      %v1331 = vrcp.pop %v1330
      %s1332 = vtos %v1331
      %s1333 = smul.f32 %s1251, %s1332
      %s1334 = scalar_select %p1328, %s1333, 0.0
      %s1335 = sadd.f32 %s1334, 0.0
      %s1336 = smul.f32 %s1289, 512.0
      %v1337 = vstv %s1329
      %v1338 = vrcp.pop %v1337
      %s1339 = vtos %v1338
      %s1340 = smul.f32 %s1336, %s1339
      %s1341 = scalar_select %p1328, %s1340, 0.0
      %s1342 = sadd.f32 %s1341, 0.0
      %s1343 = smul.f32 %s1213, %s1213
      %s1344 = sadd.f32 %s1327, %s1343
      %s1345 = scalar_select %p1328, %s1344, 0.0
      %s1346 = sadd.f32 %s1345, 0.0
      %v1347 = vld [vmem:[%s848] sm:$0xf]
      %v1349 = vlaneseq
      %v1350 = vshrl.u32 %v1349, 7
      %v1351 = vsub.s32 0, %v1350
      %v1352 = vrot.slane %v1347, %v1351
      %v1353 = vlaneseq
      %v1354 = vshrl.u32 %v1353, 7
      %v1355 = vsub.s32 1, %v1354
      %v1356 = vrot.slane %v1347, %v1355
      %v1357 = vlaneseq
      %v1358 = vshrl.u32 %v1357, 7
      %v1359 = vsub.s32 2, %v1358
      %v1360 = vrot.slane %v1347, %v1359
      %v1361 = vlaneseq
      %v1362 = vshrl.u32 %v1361, 7
      %v1363 = vsub.s32 3, %v1362
      %v1364 = vrot.slane %v1347, %v1363
      %v1369 = vsel %vm1197, %v1352, 0.0
      %v1370 = vsel %vm1197, %v1356, 0.0
      %v1371 = vadd.f32 %v1369, %v1370
      %v1372 = vsel %vm1197, %v1360, 0.0
      %v1373 = vadd.f32 %v1371, %v1372
      %v1374 = vsel %vm1197, %v1364, 0.0
      %v1375 = vadd.f32 %v1373, %v1374
      %1376 = vadd.xlane.f32.xlu0 %v1375
      %v1377 = vpop.xlane.xlu0 %1376
      %v1378 = vrot.slane %v1377, 4
      %v1379 = vadd.f32 %v1377, %v1378
      %v1380 = vrot.slane %v1379, 2
      %v1381 = vadd.f32 %v1379, %v1380
      %v1382 = vrot.slane %v1381, 1
      %v1383 = vadd.f32 %v1381, %v1382
      %s1384 = vtos %v1383
      %v1385 = vld [vmem:[%s917] sm:$0xf]
      %v1387 = vlaneseq
      %v1388 = vshrl.u32 %v1387, 7
      %v1389 = vsub.s32 0, %v1388
      %v1390 = vrot.slane %v1385, %v1389
      %v1391 = vlaneseq
      %v1392 = vshrl.u32 %v1391, 7
      %v1393 = vsub.s32 1, %v1392
      %v1394 = vrot.slane %v1385, %v1393
      %v1395 = vlaneseq
      %v1396 = vshrl.u32 %v1395, 7
      %v1397 = vsub.s32 2, %v1396
      %v1398 = vrot.slane %v1385, %v1397
      %v1399 = vlaneseq
      %v1400 = vshrl.u32 %v1399, 7
      %v1401 = vsub.s32 3, %v1400
      %v1402 = vrot.slane %v1385, %v1401
      %v1407 = vsel %vm1197, %v1390, 0.0
      %v1408 = vsel %vm1197, %v1394, 0.0
      %v1409 = vadd.f32 %v1407, %v1408
      %v1410 = vsel %vm1197, %v1398, 0.0
      %v1411 = vadd.f32 %v1409, %v1410
      %v1412 = vsel %vm1197, %v1402, 0.0
      %v1413 = vadd.f32 %v1411, %v1412
      %1414 = vadd.xlane.f32.xlu0 %v1413
      %v1415 = vpop.xlane.xlu0 %1414
      %v1416 = vrot.slane %v1415, 4
      %v1417 = vadd.f32 %v1415, %v1416
      %v1418 = vrot.slane %v1417, 2
      %v1419 = vadd.f32 %v1417, %v1418
      %v1420 = vrot.slane %v1419, 1
      %v1421 = vadd.f32 %v1419, %v1420
      %s1422 = vtos %v1421
      %v1423 = vld [vmem:[%s1002] sm:$0xf]
      %v1425 = vlaneseq
      %v1426 = vshrl.u32 %v1425, 7
      %v1427 = vsub.s32 0, %v1426
      %v1428 = vrot.slane %v1423, %v1427
      %v1429 = vlaneseq
      %v1430 = vshrl.u32 %v1429, 7
      %v1431 = vsub.s32 1, %v1430
      %v1432 = vrot.slane %v1423, %v1431
      %v1433 = vlaneseq
      %v1434 = vshrl.u32 %v1433, 7
      %v1435 = vsub.s32 2, %v1434
      %v1436 = vrot.slane %v1423, %v1435
      %v1437 = vlaneseq
      %v1438 = vshrl.u32 %v1437, 7
      %v1439 = vsub.s32 3, %v1438
      %v1440 = vrot.slane %v1423, %v1439
      %v1445 = vsel %vm1197, %v1428, 0.0
      %v1446 = vsel %vm1197, %v1432, 0.0
      %v1447 = vadd.f32 %v1445, %v1446
      %v1448 = vsel %vm1197, %v1436, 0.0
      %v1449 = vadd.f32 %v1447, %v1448
      %v1450 = vsel %vm1197, %v1440, 0.0
      %v1451 = vadd.f32 %v1449, %v1450
      %1452 = vadd.xlane.f32.xlu0 %v1451
      %v1453 = vpop.xlane.xlu0 %1452
      %v1454 = vrot.slane %v1453, 4
      %v1455 = vadd.f32 %v1453, %v1454
      %v1456 = vrot.slane %v1455, 2
      %v1457 = vadd.f32 %v1455, %v1456
      %v1458 = vrot.slane %v1457, 1
      %v1459 = vadd.f32 %v1457, %v1458
      %s1460 = vtos %v1459
      %v1461 = vld [vmem:[%s1087] sm:$0xf]
      %v1463 = vlaneseq
      %v1464 = vshrl.u32 %v1463, 7
      %v1465 = vsub.s32 0, %v1464
      %v1466 = vrot.slane %v1461, %v1465
      %v1467 = vlaneseq
      %v1468 = vshrl.u32 %v1467, 7
      %v1469 = vsub.s32 1, %v1468
      %v1470 = vrot.slane %v1461, %v1469
      %v1471 = vlaneseq
      %v1472 = vshrl.u32 %v1471, 7
      %v1473 = vsub.s32 2, %v1472
      %v1474 = vrot.slane %v1461, %v1473
      %v1475 = vlaneseq
      %v1476 = vshrl.u32 %v1475, 7
      %v1477 = vsub.s32 3, %v1476
      %v1478 = vrot.slane %v1461, %v1477
      %v1483 = vsel %vm1197, %v1466, 0.0
      %v1484 = vsel %vm1197, %v1470, 0.0
      %v1485 = vadd.f32 %v1483, %v1484
      %v1486 = vsel %vm1197, %v1474, 0.0
      %v1487 = vadd.f32 %v1485, %v1486
      %v1488 = vsel %vm1197, %v1478, 0.0
      %v1489 = vadd.f32 %v1487, %v1488
      %1490 = vadd.xlane.f32.xlu0 %v1489
      %v1491 = vpop.xlane.xlu0 %1490
      %v1492 = vrot.slane %v1491, 4
      %v1493 = vadd.f32 %v1491, %v1492
      %v1494 = vrot.slane %v1493, 2
      %v1495 = vadd.f32 %v1493, %v1494
      %v1496 = vrot.slane %v1495, 1
      %v1497 = vadd.f32 %v1495, %v1496
      %s1498 = vtos %v1497
      %p1499 = scmp.gt.f32.partialorder %s1384, 0.0
      %s1500 = scalar_select %p1499, %s1384, 1.0
      %v1501 = vstv %s1500
      %v1502 = vrcp.pop %v1501
      %s1503 = vtos %v1502
      %s1504 = smul.f32 %s1422, %s1503
      %s1505 = scalar_select %p1499, %s1504, 0.0
      %s1506 = sadd.f32 %s1335, %s1505
      %s1507 = smul.f32 %s1460, 512.0
      %v1508 = vstv %s1500
      %v1509 = vrcp.pop %v1508
      %s1510 = vtos %v1509
      %s1511 = smul.f32 %s1507, %s1510
      %s1512 = scalar_select %p1499, %s1511, 0.0
      %s1513 = sadd.f32 %s1342, %s1512
      %s1514 = smul.f32 %s1384, %s1384
      %s1515 = sadd.f32 %s1498, %s1514
      %s1516 = scalar_select %p1499, %s1515, 0.0
      %s1517 = sadd.f32 %s1346, %s1516
      %s1518 = smul.f32 %s1513, 2.0
      %s1519 = sadd.f32 %s1517, 1e-16
      %v1520 = vstv %s1519
      %v1521 = vrcp.pop %v1520
      %s1522 = vtos %v1521
      %s1523 = smul.f32 %s1518, %s1522
      %s1524 = ssub.f32 1.0, %s1523
      %s1525 = scalar_lea.smem [#allocation8], 0
      %1526 = sst [smem:[%s1525]] %s1524
      %s1527 = scalar_lea.smem [#allocation8], 1
      %1528 = sst [smem:[%s1527]] %s1506
    $region25: #{tpu_custom_call.1} parent=1 // pred_fallthru
      _
    // Predicated region
    $region26: #{tpu_custom_call.1} parent=1 // pred_check
      _
    $region27: #{tpu_custom_call.1} parent=1 // pred_check_branch
      %1530 = sbr.rel (0) target = $region29
    $region28: #{tpu_custom_call.1} parent=1 // pred_region
      %s1532 = ssub.s32 16, 16
      %1533 = vsyncadd [#allocation5], %s1532
      %1536 = dma.smem_to_hbm [#allocation8], 16, %s2, [#allocation5]
    $region29: #{tpu_custom_call.1} parent=1 // pred_fallthru
      _
    // Predicated region
    $region30: #{tpu_custom_call.1} parent=1 // pred_check
      _
    $region31: #{tpu_custom_call.1} parent=1 // pred_check_branch
      %1538 = sbr.rel (0) target = $region33
    $region32: #{tpu_custom_call.1} parent=1 // pred_region
      %1539 = dma.done [#allocation5], 16
    $region33: #{tpu_custom_call.1} parent=1 // pred_fallthru
      _
    %1540 = sfence
    %1541 = vsyncpa [#allocation4], 1
    %1542 = vsyncpa [#allocation7], 1
    %1543 = vsyncpa [#allocation5], 1

</llo_original>
